<compile_context>
chip_gen: v7x
topology: tpu7x:2x2x1
jax: 0.10.0
libtpu: 0.0.40
codegen_flags: <defaults>
</compile_context>

<pallas_src>
import functools

import jax
import jax.numpy as jnp
from jax import lax
from jax.experimental import pallas as pl
from jax.experimental.pallas import tpu as pltpu


def _round_up(n, m):
    return ((n + m - 1) // m) * m


# ----------------------------------------------------------------------------------
# Kernels
# ----------------------------------------------------------------------------------

def _mlp_tail(pre, wf_ref, bf_ref, wo_ref, bo_ref, out_ref, act_dtype):
    """Shared tail: tanh -> hidden_fc -> tanh -> lane-dense final projection."""
    tanh1 = jnp.tanh(pre.astype(act_dtype))                          # [TB, H_pad]
    pre2 = jnp.dot(tanh1.astype(jnp.bfloat16), wf_ref[...],
                   preferred_element_type=jnp.float32) + bf_ref[...]  # [TB, Hh_pad] f32
    fc1 = jnp.tanh(pre2.astype(act_dtype))                           # [TB, Hh_pad]
    wo = wo_ref[...].astype(fc1.dtype)                               # [1, Hh_pad]
    # Final projection as wo @ fc1^T on the MXU -> [1, TB] row (lane-dense store).
    z_row = lax.dot_general(wo, fc1, (((1,), (1,)), ((), ())),
                            preferred_element_type=jnp.float32)      # [1, TB]
    out_ref[...] = (z_row + bo_ref[0, 0]).astype(out_ref.dtype)


def er_mlp_gather_kernel(h_ref, r_ref, t_ref, ent_ref, rel_ref,
                         w1_ref, w2_ref, w3_ref, wf_ref, bf_ref, wo_ref, bo_ref,
                         out_ref, *, act_dtype):
    # h/r/t_ref : [TB, 1] int32 (streamed)      ent/rel_ref : [N, E] bf16 (resident)
    # w1/2/3    : [E, H_pad] bf16               wf : [H_pad, Hh_pad] bf16
    # bf, wo    : [1, Hh_pad] f32               bo : (1, 1) f32 SMEM
    # out_ref   : [1, TB] f32
    def gather(idx_ref, tbl_ref):
        idx = idx_ref[...]                                            # [TB, 1] int32
        tbl = tbl_ref[...]                                            # [N, E] bf16
        n = tbl.shape[0]
        sel = lax.broadcasted_iota(jnp.int32, (idx.shape[0], n), 1) == idx
        # Exact one-hot row gather on the MXU (one nonzero term per row).
        return jnp.dot(sel.astype(tbl.dtype), tbl,
                       preferred_element_type=jnp.float32).astype(jnp.bfloat16)

    xh = gather(h_ref, ent_ref)                                       # [TB, E] bf16
    xr = gather(r_ref, rel_ref)
    xt = gather(t_ref, ent_ref)
    pre = (jnp.dot(xh, w1_ref[...], preferred_element_type=jnp.float32)
           + jnp.dot(xr, w2_ref[...], preferred_element_type=jnp.float32)
           + jnp.dot(xt, w3_ref[...], preferred_element_type=jnp.float32))
    _mlp_tail(pre, wf_ref, bf_ref, wo_ref, bo_ref, out_ref, act_dtype)


def er_mlp_xin_kernel(x_ref, w123_ref, wf_ref, bf_ref, wo_ref, bo_ref, out_ref, *,
                      act_dtype):
    # Fallback path (wrapper-side gather): x_ref [TB, 3E] bf16, w123 [3E, H_pad] bf16.
    pre = jnp.dot(x_ref[...], w123_ref[...], preferred_element_type=jnp.float32)
    _mlp_tail(pre, wf_ref, bf_ref, wo_ref, bo_ref, out_ref, act_dtype)


# ----------------------------------------------------------------------------------
# Parameters
# ----------------------------------------------------------------------------------

def init_params(key, tot_entity, tot_relation, emb_size, hidden_size):
    """Master (f32) parameters, mirroring the PyTorch module."""
    ks = jax.random.split(key, 9)
    half = hidden_size // 2
    return {
        "ent_emb": jax.random.normal(ks[0], (tot_entity, emb_size), jnp.float32),
        "rel_emb": jax.random.normal(ks[1], (tot_relation, emb_size), jnp.float32),
        # nn.Linear weights stored transposed: [in, out]
        "W1": jax.random.normal(ks[2], (emb_size, hidden_size), jnp.float32) * 0.1,
        "W2": jax.random.normal(ks[3], (emb_size, hidden_size), jnp.float32) * 0.1,
        "W3": jax.random.normal(ks[4], (emb_size, hidden_size), jnp.float32) * 0.1,
        "Wf": jax.random.normal(ks[5], (hidden_size, half), jnp.float32) * 0.1,
        "bf": jax.random.normal(ks[6], (1, half), jnp.float32) * 0.1,
        "Wo": jax.random.normal(ks[7], (half, 1), jnp.float32) * 0.1,
        "bo": jax.random.normal(ks[8], (1, 1), jnp.float32) * 0.1,
    }


def prepare_params(params):
    """Kernel-friendly prep: pad H / H/2 lane dims to 128, cast to bf16.

    The K (=3E) and embedding (=E) dimensions are deliberately NOT padded; full-array
    blocks make sub-128 last dims legal and padding would only inflate streamed bytes.
    Table row counts are padded to a multiple of 8 (sublane alignment); padded rows
    are all-zero and never selected.
    """
    E, H = params["W1"].shape
    Hh = params["Wf"].shape[1]
    h_pad, hh_pad = _round_up(H, 128), _round_up(Hh, 128)

    def pad_cols(w, cols):
        return jnp.pad(w, ((0, 0), (0, cols - w.shape[1])))

    def pad_rows8(w):
        r = _round_up(w.shape[0], 8)
        return jnp.pad(w, ((0, r - w.shape[0]), (0, 0)))

    w1 = pad_cols(params["W1"], h_pad).astype(jnp.bfloat16)
    w2 = pad_cols(params["W2"], h_pad).astype(jnp.bfloat16)
    w3 = pad_cols(params["W3"], h_pad).astype(jnp.bfloat16)
    wf = jnp.pad(params["Wf"], ((0, h_pad - H), (0, hh_pad - Hh))).astype(jnp.bfloat16)
    return {
        "ent_emb": pad_rows8(params["ent_emb"]).astype(jnp.bfloat16),
        "rel_emb": pad_rows8(params["rel_emb"]).astype(jnp.bfloat16),
        "W1": w1, "W2": w2, "W3": w3,
        "W123": jnp.concatenate([w1, w2, w3], axis=0),   # [3E, H_pad], fallback path
        "Wf": wf,
        "bf": pad_cols(params["bf"], hh_pad).astype(jnp.float32),
        "wo_row": pad_cols(params["Wo"].T, hh_pad).astype(jnp.float32),
        "bo": params["bo"].astype(jnp.float32),          # (1, 1) -> SMEM scalar
    }


# ----------------------------------------------------------------------------------
# Generation-aware planning helpers
# ----------------------------------------------------------------------------------

def _device_kind():
    try:
        return jax.devices()[0].device_kind.lower()
    except Exception:
        return ""


def _vmem_plan():
    """(tile-selection budget, max TB, vmem_limit_bytes), derived from the chip."""
    try:
        cap = int(pltpu.get_tpu_info().vmem_capacity_bytes)
    except Exception:
        cap = 64 * 1024 * 1024                       # conservative (v7x-sized) default
    budget = (cap * 3) // 4                          # leaves compiler/scratch headroom
    tb_cap = 4096 if cap >= 96 * 1024 * 1024 else 2048
    vmem_limit = min((cap * 4) // 5, budget + (16 << 20))
    return budget, tb_cap, vmem_limit


def _choose_tile_b(fixed_bytes, per_row_bytes, budget_bytes, tb_cap):
    for cand in (4096, 2048, 1024, 512, 256, 128):
        if cand <= tb_cap and fixed_bytes + cand * per_row_bytes <= budget_bytes:
            return cand
    return 128


# ----------------------------------------------------------------------------------
# Forward
# ----------------------------------------------------------------------------------

@functools.partial(jax.jit, static_argnames=("tb", "b_pad", "act_bf16",
                                              "in_kernel_gather", "vmem_limit"))
def _er_mlp_forward_impl(h_idx, r_idx, t_idx, prepped, *, tb, b_pad, act_bf16,
                         in_kernel_gather, vmem_limit):
    B = h_idx.shape[0]
    act_dtype = jnp.bfloat16 if act_bf16 else jnp.float32
    cparams = pltpu.CompilerParams(dimension_semantics=("parallel",),
                                   vmem_limit_bytes=vmem_limit)
    n_tiles = b_pad // tb
    wf, bf, wo, bo = prepped["Wf"], prepped["bf"], prepped["wo_row"], prepped["bo"]

    def full(a):  # VMEM-resident whole-array operand (constant block index)
        return pl.BlockSpec(a.shape, lambda i: (0, 0))

    if in_kernel_gather:
        def pad_idx(v):
            v = v.astype(jnp.int32).reshape(-1)
            return jnp.pad(v, (0, b_pad - B)).reshape(b_pad, 1)

        hh, rr, tt = pad_idx(h_idx), pad_idx(r_idx), pad_idx(t_idx)
        ent, rel = prepped["ent_emb"], prepped["rel_emb"]
        w1, w2, w3 = prepped["W1"], prepped["W2"], prepped["W3"]
        kernel = functools.partial(er_mlp_gather_kernel, act_dtype=act_dtype)
        out = pl.pallas_call(
            kernel,
            out_shape=jax.ShapeDtypeStruct((1, b_pad), jnp.float32),
            grid=(n_tiles,),
            in_specs=[
                pl.BlockSpec((tb, 1), lambda i: (i, 0)),      # h indices (streamed)
                pl.BlockSpec((tb, 1), lambda i: (i, 0)),      # r indices
                pl.BlockSpec((tb, 1), lambda i: (i, 0)),      # t indices
                full(ent), full(rel),                         # embedding tables
                full(w1), full(w2), full(w3),                 # first-layer weights
                full(wf), full(bf), full(wo),                 # tail weights / biases
                pl.BlockSpec(memory_space=pltpu.MemorySpace.SMEM),   # bo scalar
            ],
            out_specs=pl.BlockSpec((1, tb), lambda i: (0, i)),
            compiler_params=cparams,
        )(hh, rr, tt, ent, rel, w1, w2, w3, wf, bf, wo, bo)
    else:
        # Fallback: gather in (jit-fused) glue, stream the unpadded-K activation.
        ent, rel = prepped["ent_emb"], prepped["rel_emb"]
        x = jnp.concatenate([ent[h_idx], rel[r_idx], ent[t_idx]], axis=-1)  # [B,3E] bf16
        x = jnp.pad(x, ((0, b_pad - B), (0, 0)))
        w123 = prepped["W123"]
        kernel = functools.partial(er_mlp_xin_kernel, act_dtype=act_dtype)
        k3e = x.shape[1]
        out = pl.pallas_call(
            kernel,
            out_shape=jax.ShapeDtypeStruct((1, b_pad), jnp.float32),
            grid=(n_tiles,),
            in_specs=[
                pl.BlockSpec((tb, k3e), lambda i: (i, 0)),    # activation (streamed)
                full(w123), full(wf), full(bf), full(wo),
                pl.BlockSpec(memory_space=pltpu.MemorySpace.SMEM),   # bo scalar
            ],
            out_specs=pl.BlockSpec((1, tb), lambda i: (0, i)),
            compiler_params=cparams,
        )(x, w123, wf, bf, wo, bo)

    return out[0, :B].reshape(B, 1)


def er_mlp_forward(h_idx, r_idx, t_idx, prepped, *, force_wrapper_gather=False,
                   tile_b=None):
    """ER-MLP forward.  tile_b, if given, must be a multiple of 128."""
    B = int(h_idx.shape[0])
    E = prepped["W1"].shape[0]
    h_pad = prepped["W1"].shape[1]
    hh_pad = prepped["Wf"].shape[1]
    ne = prepped["ent_emb"].shape[0]
    nr = prepped["rel_emb"].shape[0]

    kind = _device_kind()
    act_bf16 = ("v6" in kind) or ("v7" in kind) or ("7x" in kind)   # bf16 EUP/VPU gens
    num_tc = 2 if (("v7" in kind) or ("7x" in kind)) else 1          # v7x: 2 TCs/chip
    budget, tb_cap, vmem_limit = _vmem_plan()

    def nbytes(a):
        return a.size * a.dtype.itemsize

    # Resident operands are charged x2 (default double-buffering of constant blocks).
    fixed_common = 2 * (nbytes(prepped["Wf"]) + nbytes(prepped["bf"])
                        + nbytes(prepped["wo_row"]))
    fixed_gather = fixed_common + 2 * (nbytes(prepped["ent_emb"])
                                       + nbytes(prepped["rel_emb"])
                                       + nbytes(prepped["W1"]) + nbytes(prepped["W2"])
                                       + nbytes(prepped["W3"]))
    per_row_gather = 32 + 4 * (2 * ne + nr) + 6 * E + 12 * (h_pad + hh_pad)
    fixed_fb = fixed_common + 2 * nbytes(prepped["W123"])
    per_row_fb = 12 * E + 8 + 12 * (h_pad + hh_pad)

    in_kernel_gather = (not force_wrapper_gather) and \
        (fixed_gather + 128 * per_row_gather <= budget)
    fixed, per_row = ((fixed_gather, per_row_gather) if in_kernel_gather
                      else (fixed_fb, per_row_fb))

    tb_fit = _choose_tile_b(fixed, per_row, budget, tb_cap)
    b_ceil = max(128, _round_up(B, 128))
    tb = tile_b if tile_b is not None else min(tb_fit, b_ceil)
    b_pad = _round_up(B, tb)
    # v7x: make sure the "parallel" batch grid has >= 2 steps so both TCs get work.
    if tile_b is None and num_tc > 1 and b_pad >= 256 and b_pad // tb < 2:
        tb = _round_up(b_pad // 2, 128)
        b_pad = _round_up(B, tb)

    return _er_mlp_forward_impl(h_idx, r_idx, t_idx, prepped,
                                tb=int(tb), b_pad=int(b_pad),
                                act_bf16=bool(act_bf16),
                                in_kernel_gather=bool(in_kernel_gather),
                                vmem_limit=int(vmem_limit))


# ----------------------------------------------------------------------------------
# References
# ----------------------------------------------------------------------------------

def reference_forward_prepped(h_idx, r_idx, t_idx, prepped):
    """f32 math on the prepped (bf16/padded) params — isolates kernel rounding."""
    ent = prepped["ent_emb"].astype(jnp.float32)
    rel = prepped["rel_emb"].astype(jnp.float32)
    pre = (ent[h_idx] @ prepped["W1"].astype(jnp.float32)
           + rel[r_idx] @ prepped["W2"].astype(jnp.float32)
           + ent[t_idx] @ prepped["W3"].astype(jnp.float32))
    tanh1 = jnp.tanh(pre)
    fc1 = jnp.tanh(tanh1 @ prepped["Wf"].astype(jnp.float32) + prepped["bf"])
    return fc1 @ prepped["wo_row"].T + prepped["bo"]


def reference_forward_master(h_idx, r_idx, t_idx, params):
    """f32 master-weight reference (PyTorch-module semantics; see torch.cat TODO)."""
    ent, rel = params["ent_emb"], params["rel_emb"]
    pre = (ent[h_idx] @ params["W1"] + rel[r_idx] @ params["W2"]
           + ent[t_idx] @ params["W3"])
    tanh1 = jnp.tanh(pre)
    fc1 = jnp.tanh(tanh1 @ params["Wf"] + params["bf"])
    return fc1 @ params["Wo"] + params["bo"]


# ----------------------------------------------------------------------------------

if __name__ == "__main__":
    tot_entity, tot_relation = 16, 4
    emb_size, hidden_size = 32, 32
    B = 8

    key = jax.random.PRNGKey(0)
    kp, kh, kr, kt = jax.random.split(key, 4)
    params = init_params(kp, tot_entity, tot_relation, emb_size, hidden_size)
    prepped = prepare_params(params)

    h_idx = jax.random.randint(kh, (B,), 0, tot_entity)
    r_idx = jax.random.randint(kr, (B,), 0, tot_relation)
    t_idx = jax.random.randint(kt, (B,), 0, tot_entity)

    # Main path: in-kernel gather.
    z = er_mlp_forward(h_idx, r_idx, t_idx, prepped)
    jax.block_until_ready(z)
    # Fallback path (wrapper-side gather), exercised explicitly.
    z_fb = er_mlp_forward(h_idx, r_idx, t_idx, prepped, force_wrapper_gather=True)
    jax.block_until_ready(z_fb)

    z_ref = reference_forward_prepped(h_idx, r_idx, t_idx, prepped)
    z_master = reference_forward_master(h_idx, r_idx, t_idx, params)

    assert z.shape == (B, 1) and z_fb.shape == (B, 1)
    assert jnp.allclose(z, z_ref, atol=5e-2, rtol=5e-2)
    assert jnp.allclose(z_fb, z_ref, atol=5e-2, rtol=5e-2)
    assert jnp.allclose(z, z_master, atol=1e-1, rtol=1e-1)

    print("KERNEL_OK")
</pallas_src>

<mosaic_0001>
module attributes {stable_mosaic.version = 11 : i64} {
  func.func @er_mlp_gather_kernel(%arg0: i32, %arg1: memref<128x1xi32, #tpu.memory_space<vmem>>, %arg2: memref<128x1xi32, #tpu.memory_space<vmem>>, %arg3: memref<128x1xi32, #tpu.memory_space<vmem>>, %arg4: memref<16x32xbf16, #tpu.memory_space<vmem>>, %arg5: memref<8x32xbf16, #tpu.memory_space<vmem>>, %arg6: memref<32x128xbf16, #tpu.memory_space<vmem>>, %arg7: memref<32x128xbf16, #tpu.memory_space<vmem>>, %arg8: memref<32x128xbf16, #tpu.memory_space<vmem>>, %arg9: memref<128x128xbf16, #tpu.memory_space<vmem>>, %arg10: memref<1x128xf32, #tpu.memory_space<vmem>>, %arg11: memref<1x128xf32, #tpu.memory_space<vmem>>, %arg12: memref<1x1xf32, #tpu.memory_space<smem>>, %arg13: memref<1x128xf32, #tpu.memory_space<vmem>>) attributes {dimension_semantics = [#tpu.dimension_semantics<parallel>], iteration_bounds = array<i64: 1>, scalar_prefetch = 0 : i64, scratch_operands = 0 : i64, tpu.core_type = #tpu.core_type<tc>, window_params = [{transform_indices = @transform_0, window_bounds = array<i64: 128, 1>}, {transform_indices = @transform_1, window_bounds = array<i64: 128, 1>}, {transform_indices = @transform_2, window_bounds = array<i64: 128, 1>}, {pipeline_mode = #tpu.pipeline_mode<synchronous>, transform_indices = @transform_3, window_bounds = array<i64: 16, 32>}, {pipeline_mode = #tpu.pipeline_mode<synchronous>, transform_indices = @transform_4, window_bounds = array<i64: 8, 32>}, {pipeline_mode = #tpu.pipeline_mode<synchronous>, transform_indices = @transform_5, window_bounds = array<i64: 32, 128>}, {pipeline_mode = #tpu.pipeline_mode<synchronous>, transform_indices = @transform_6, window_bounds = array<i64: 32, 128>}, {pipeline_mode = #tpu.pipeline_mode<synchronous>, transform_indices = @transform_7, window_bounds = array<i64: 32, 128>}, {pipeline_mode = #tpu.pipeline_mode<synchronous>, transform_indices = @transform_8, window_bounds = array<i64: 128, 128>}, {pipeline_mode = #tpu.pipeline_mode<synchronous>, transform_indices = @transform_9, window_bounds = array<i64: 1, 128>}, {pipeline_mode = #tpu.pipeline_mode<synchronous>, transform_indices = @transform_10, window_bounds = array<i64: 1, 128>}, {transform_indices = @transform_11, window_bounds = array<i64: 1, 1>}, {transform_indices = @transform_12, window_bounds = array<i64: 1, 128>}]} {
    %c0 = arith.constant 0 : index
    %c0_0 = arith.constant 0 : index
    %0 = vector.load %arg1[%c0, %c0_0] : memref<128x1xi32, #tpu.memory_space<vmem>>, vector<128x1xi32>
    %c0_1 = arith.constant 0 : index
    %c0_2 = arith.constant 0 : index
    %1 = vector.load %arg4[%c0_1, %c0_2] : memref<16x32xbf16, #tpu.memory_space<vmem>>, vector<16x32xbf16>
    %2 = tpu.iota {dimensions = array<i32: 1>} : vector<128x16xi32>
    %3 = vector.broadcast %0 : vector<128x1xi32> to vector<128x16xi32>
    %4 = arith.cmpi eq, %2, %3 : vector<128x16xi32>
    %5 = arith.extui %4 : vector<128x16xi1> to vector<128x16xi32>
    %6 = arith.sitofp %5 : vector<128x16xi32> to vector<128x16xf32>
    %7 = arith.truncf %6 : vector<128x16xf32> to vector<128x16xbf16>
    %cst = arith.constant dense<0.000000e+00> : vector<128x32xf32>
    %8 = tpu.matmul %7, %1, %cst {dimension_numbers = #tpu.dot_dimension_numbers<[1], [0], [0], [1], [0, 0, 1, 1], [], []>} : vector<128x16xbf16>, vector<16x32xbf16>, vector<128x32xf32> -> vector<128x32xf32>
    %9 = arith.truncf %8 : vector<128x32xf32> to vector<128x32xbf16>
    %c0_3 = arith.constant 0 : index
    %c0_4 = arith.constant 0 : index
    %10 = vector.load %arg2[%c0_3, %c0_4] : memref<128x1xi32, #tpu.memory_space<vmem>>, vector<128x1xi32>
    %c0_5 = arith.constant 0 : index
    %c0_6 = arith.constant 0 : index
    %11 = vector.load %arg5[%c0_5, %c0_6] : memref<8x32xbf16, #tpu.memory_space<vmem>>, vector<8x32xbf16>
    %12 = tpu.iota {dimensions = array<i32: 1>} : vector<128x8xi32>
    %13 = vector.broadcast %10 : vector<128x1xi32> to vector<128x8xi32>
    %14 = arith.cmpi eq, %12, %13 : vector<128x8xi32>
    %15 = arith.extui %14 : vector<128x8xi1> to vector<128x8xi32>
    %16 = arith.sitofp %15 : vector<128x8xi32> to vector<128x8xf32>
    %17 = arith.truncf %16 : vector<128x8xf32> to vector<128x8xbf16>
    %cst_7 = arith.constant dense<0.000000e+00> : vector<128x32xf32>
    %18 = tpu.matmul %17, %11, %cst_7 {dimension_numbers = #tpu.dot_dimension_numbers<[1], [0], [0], [1], [0, 0, 1, 1], [], []>} : vector<128x8xbf16>, vector<8x32xbf16>, vector<128x32xf32> -> vector<128x32xf32>
    %19 = arith.truncf %18 : vector<128x32xf32> to vector<128x32xbf16>
    %c0_8 = arith.constant 0 : index
    %c0_9 = arith.constant 0 : index
    %20 = vector.load %arg3[%c0_8, %c0_9] : memref<128x1xi32, #tpu.memory_space<vmem>>, vector<128x1xi32>
    %c0_10 = arith.constant 0 : index
    %c0_11 = arith.constant 0 : index
    %21 = vector.load %arg4[%c0_10, %c0_11] : memref<16x32xbf16, #tpu.memory_space<vmem>>, vector<16x32xbf16>
    %22 = tpu.iota {dimensions = array<i32: 1>} : vector<128x16xi32>
    %23 = vector.broadcast %20 : vector<128x1xi32> to vector<128x16xi32>
    %24 = arith.cmpi eq, %22, %23 : vector<128x16xi32>
    %25 = arith.extui %24 : vector<128x16xi1> to vector<128x16xi32>
    %26 = arith.sitofp %25 : vector<128x16xi32> to vector<128x16xf32>
    %27 = arith.truncf %26 : vector<128x16xf32> to vector<128x16xbf16>
    %cst_12 = arith.constant dense<0.000000e+00> : vector<128x32xf32>
    %28 = tpu.matmul %27, %21, %cst_12 {dimension_numbers = #tpu.dot_dimension_numbers<[1], [0], [0], [1], [0, 0, 1, 1], [], []>} : vector<128x16xbf16>, vector<16x32xbf16>, vector<128x32xf32> -> vector<128x32xf32>
    %29 = arith.truncf %28 : vector<128x32xf32> to vector<128x32xbf16>
    %c0_13 = arith.constant 0 : index
    %c0_14 = arith.constant 0 : index
    %30 = vector.load %arg6[%c0_13, %c0_14] : memref<32x128xbf16, #tpu.memory_space<vmem>>, vector<32x128xbf16>
    %cst_15 = arith.constant dense<0.000000e+00> : vector<128x128xf32>
    %31 = tpu.matmul %9, %30, %cst_15 {dimension_numbers = #tpu.dot_dimension_numbers<[1], [0], [0], [1], [0, 0, 1, 1], [], []>} : vector<128x32xbf16>, vector<32x128xbf16>, vector<128x128xf32> -> vector<128x128xf32>
    %c0_16 = arith.constant 0 : index
    %c0_17 = arith.constant 0 : index
    %32 = vector.load %arg7[%c0_16, %c0_17] : memref<32x128xbf16, #tpu.memory_space<vmem>>, vector<32x128xbf16>
    %cst_18 = arith.constant dense<0.000000e+00> : vector<128x128xf32>
    %33 = tpu.matmul %19, %32, %cst_18 {dimension_numbers = #tpu.dot_dimension_numbers<[1], [0], [0], [1], [0, 0, 1, 1], [], []>} : vector<128x32xbf16>, vector<32x128xbf16>, vector<128x128xf32> -> vector<128x128xf32>
    %34 = arith.addf %31, %33 : vector<128x128xf32>
    %c0_19 = arith.constant 0 : index
    %c0_20 = arith.constant 0 : index
    %35 = vector.load %arg8[%c0_19, %c0_20] : memref<32x128xbf16, #tpu.memory_space<vmem>>, vector<32x128xbf16>
    %cst_21 = arith.constant dense<0.000000e+00> : vector<128x128xf32>
    %36 = tpu.matmul %29, %35, %cst_21 {dimension_numbers = #tpu.dot_dimension_numbers<[1], [0], [0], [1], [0, 0, 1, 1], [], []>} : vector<128x32xbf16>, vector<32x128xbf16>, vector<128x128xf32> -> vector<128x128xf32>
    %37 = arith.addf %34, %36 : vector<128x128xf32>
    %38 = math.tanh %37 : vector<128x128xf32>
    %39 = arith.truncf %38 : vector<128x128xf32> to vector<128x128xbf16>
    %c0_22 = arith.constant 0 : index
    %c0_23 = arith.constant 0 : index
    %40 = vector.load %arg9[%c0_22, %c0_23] : memref<128x128xbf16, #tpu.memory_space<vmem>>, vector<128x128xbf16>
    %cst_24 = arith.constant dense<0.000000e+00> : vector<128x128xf32>
    %41 = tpu.matmul %39, %40, %cst_24 {dimension_numbers = #tpu.dot_dimension_numbers<[1], [0], [0], [1], [0, 0, 1, 1], [], []>} : vector<128x128xbf16>, vector<128x128xbf16>, vector<128x128xf32> -> vector<128x128xf32>
    %c0_25 = arith.constant 0 : index
    %c0_26 = arith.constant 0 : index
    %42 = vector.load %arg10[%c0_25, %c0_26] : memref<1x128xf32, #tpu.memory_space<vmem>>, vector<1x128xf32>
    %43 = vector.broadcast %42 : vector<1x128xf32> to vector<128x128xf32>
    %44 = arith.addf %41, %43 : vector<128x128xf32>
    %45 = math.tanh %44 : vector<128x128xf32>
    %c0_27 = arith.constant 0 : index
    %c0_28 = arith.constant 0 : index
    %46 = vector.load %arg11[%c0_27, %c0_28] : memref<1x128xf32, #tpu.memory_space<vmem>>, vector<1x128xf32>
    %cst_29 = arith.constant dense<0.000000e+00> : vector<1x128xf32>
    %47 = tpu.matmul %46, %45, %cst_29 {dimension_numbers = #tpu.dot_dimension_numbers<[1], [1], [0], [0], [0, 0, 1, 0], [], []>} : vector<1x128xf32>, vector<128x128xf32>, vector<1x128xf32> -> vector<1x128xf32>
    %c0_30 = arith.constant 0 : index
    %c0_31 = arith.constant 0 : index
    %48 = memref.load %arg12[%c0_30, %c0_31] : memref<1x1xf32, #tpu.memory_space<smem>>
    %49 = vector.broadcast %48 : f32 to vector<1x128xf32>
    %50 = arith.addf %47, %49 : vector<1x128xf32>
    %c0_32 = arith.constant 0 : index
    %c0_33 = arith.constant 0 : index
    %51 = vector.load %arg13[%c0_32, %c0_33] : memref<1x128xf32, #tpu.memory_space<vmem>>, vector<1x128xf32>
    tpu.vector_store %arg13[%c0_32, %c0_33], %50 {strides = array<i32>} : memref<1x128xf32, #tpu.memory_space<vmem>>, vector<1x128xf32>,
    return
  }
  func.func @transform_0(%arg0: i32) -> (i32, i32) {
    %c0_i32 = arith.constant 0 : i32
    %c0_i32_0 = arith.constant 0 : i32
    return %arg0, %c0_i32 : i32, i32
  }
  func.func @transform_1(%arg0: i32) -> (i32, i32) {
    %c0_i32 = arith.constant 0 : i32
    %c0_i32_0 = arith.constant 0 : i32
    return %arg0, %c0_i32 : i32, i32
  }
  func.func @transform_2(%arg0: i32) -> (i32, i32) {
    %c0_i32 = arith.constant 0 : i32
    %c0_i32_0 = arith.constant 0 : i32
    return %arg0, %c0_i32 : i32, i32
  }
  func.func @transform_3(%arg0: i32) -> (i32, i32) {
    %c0_i32 = arith.constant 0 : i32
    %c0_i32_0 = arith.constant 0 : i32
    %c0_i32_1 = arith.constant 0 : i32
    return %c0_i32, %c0_i32_0 : i32, i32
  }
  func.func @transform_4(%arg0: i32) -> (i32, i32) {
    %c0_i32 = arith.constant 0 : i32
    %c0_i32_0 = arith.constant 0 : i32
    %c0_i32_1 = arith.constant 0 : i32
    return %c0_i32, %c0_i32_0 : i32, i32
  }
  func.func @transform_5(%arg0: i32) -> (i32, i32) {
    %c0_i32 = arith.constant 0 : i32
    %c0_i32_0 = arith.constant 0 : i32
    %c0_i32_1 = arith.constant 0 : i32
    return %c0_i32, %c0_i32_0 : i32, i32
  }
  func.func @transform_6(%arg0: i32) -> (i32, i32) {
    %c0_i32 = arith.constant 0 : i32
    %c0_i32_0 = arith.constant 0 : i32
    %c0_i32_1 = arith.constant 0 : i32
    return %c0_i32, %c0_i32_0 : i32, i32
  }
  func.func @transform_7(%arg0: i32) -> (i32, i32) {
    %c0_i32 = arith.constant 0 : i32
    %c0_i32_0 = arith.constant 0 : i32
    %c0_i32_1 = arith.constant 0 : i32
    return %c0_i32, %c0_i32_0 : i32, i32
  }
  func.func @transform_8(%arg0: i32) -> (i32, i32) {
    %c0_i32 = arith.constant 0 : i32
    %c0_i32_0 = arith.constant 0 : i32
    %c0_i32_1 = arith.constant 0 : i32
    return %c0_i32, %c0_i32_0 : i32, i32
  }
  func.func @transform_9(%arg0: i32) -> (i32, i32) {
    %c0_i32 = arith.constant 0 : i32
    %c0_i32_0 = arith.constant 0 : i32
    %c0_i32_1 = arith.constant 0 : i32
    return %c0_i32, %c0_i32_0 : i32, i32
  }
  func.func @transform_10(%arg0: i32) -> (i32, i32) {
    %c0_i32 = arith.constant 0 : i32
    %c0_i32_0 = arith.constant 0 : i32
    %c0_i32_1 = arith.constant 0 : i32
    return %c0_i32, %c0_i32_0 : i32, i32
  }
  func.func @transform_11(%arg0: i32) -> (i32, i32) {
    %c0_i32 = arith.constant 0 : i32
    %c0_i32_0 = arith.constant 0 : i32
    %c0_i32_1 = arith.constant 0 : i32
    return %c0_i32, %c0_i32_0 : i32, i32
  }
  func.func @transform_12(%arg0: i32) -> (i32, i32) {
    %c0_i32 = arith.constant 0 : i32
    %c0_i32_0 = arith.constant 0 : i32
    return %c0_i32, %arg0 : i32, i32
  }
}

</mosaic_0001>

<llo_original>
// kernel: _er_mlp_forward_impl.1
$region0: #{_er_mlp_forward_impl.1}
  #allocation0 [shape = 'u32[]', space=smem, size = 0x4, offset = 0x4, fixed_abs, tag = 'smem constant byte address 0x4 - core index']
  #allocation1 [shape = 'u32[144,128]{1,0:T(1,128)}', space=vmem, size = 0x12000, scoped, tag = 'internal scratch']
  #allocation2 [shape = 'f32[1,1]{1,0:T(1,128)S(6)}', space=smem, size = 0x200, scoped, tag = 'scoped memory for _er_mlp_forward_impl.1']
  %s0 = inlined_call_operand.vmem [shape: s32[128,1], index: 0, kind: input, shape index: {}]
  %s1 = inlined_call_operand.vmem [shape: s32[128,1], index: 1, kind: input, shape index: {}]
  %s2 = inlined_call_operand.vmem [shape: s32[128,1], index: 2, kind: input, shape index: {}]
  %s3 = inlined_call_operand.vmem [shape: bf16[16,32], index: 3, kind: input, shape index: {}]
  %s4 = inlined_call_operand.vmem [shape: bf16[8,32], index: 4, kind: input, shape index: {}]
  %s5 = inlined_call_operand.vmem [shape: bf16[32,128], index: 5, kind: input, shape index: {}]
  %s6 = inlined_call_operand.vmem [shape: bf16[32,128], index: 6, kind: input, shape index: {}]
  %s7 = inlined_call_operand.vmem [shape: bf16[32,128], index: 7, kind: input, shape index: {}]
  %s8 = inlined_call_operand.vmem [shape: bf16[128,128], index: 8, kind: input, shape index: {}]
  %s9 = inlined_call_operand.vmem [shape: f32[1,128], index: 9, kind: input, shape index: {}]
  %s10 = inlined_call_operand.vmem [shape: f32[1,128], index: 10, kind: input, shape index: {}]
  %s11 = inlined_call_operand.<no memory space> [shape: f32[1,1], index: 11, kind: input, shape index: {}]
  %s12 = inlined_call_operand.vmem [shape: f32[1,128], index: 12, kind: output, shape index: {}]
  %s13 = sld [smem:[#allocation0]]
  $region58: #{_er_mlp_forward_impl.1} parent=0
    _
  %s15 = ssub.s32 1, %s13
  %s16 = scalar_select 0, %s15, %s13
  %17 = sst [smem:[#allocation2]] %s11
  // Predicated region
  $region2: #{_er_mlp_forward_impl.1} parent=0 // pred_check
    _
  $region3: #{_er_mlp_forward_impl.1} parent=0 // pred_check_branch
    %19 = sbr.rel (0) target = $region5
  $region4: #{_er_mlp_forward_impl.1} parent=0 // pred_region
    _
  $region5: #{_er_mlp_forward_impl.1} parent=0 // pred_fallthru
    _
  // Predicated region
  $region6: #{_er_mlp_forward_impl.1} parent=0 // pred_check
    _
  $region7: #{_er_mlp_forward_impl.1} parent=0 // pred_check_branch
    %21 = sbr.rel (0) target = $region9
  $region8: #{_er_mlp_forward_impl.1} parent=0 // pred_region
    _
  $region9: #{_er_mlp_forward_impl.1} parent=0 // pred_fallthru
    _
  // Predicated region
  $region10: #{_er_mlp_forward_impl.1} parent=0 // pred_check
    _
  $region11: #{_er_mlp_forward_impl.1} parent=0 // pred_check_branch
    %23 = sbr.rel (0) target = $region13
  $region12: #{_er_mlp_forward_impl.1} parent=0 // pred_region
    _
  $region13: #{_er_mlp_forward_impl.1} parent=0 // pred_fallthru
    _
  // Predicated region
  $region14: #{_er_mlp_forward_impl.1} parent=0 // pred_check
    _
  $region15: #{_er_mlp_forward_impl.1} parent=0 // pred_check_branch
    %25 = sbr.rel (0) target = $region17
  $region16: #{_er_mlp_forward_impl.1} parent=0 // pred_region
    _
  $region17: #{_er_mlp_forward_impl.1} parent=0 // pred_fallthru
    _
  // Predicated region
  $region18: #{_er_mlp_forward_impl.1} parent=0 // pred_check
    _
  $region19: #{_er_mlp_forward_impl.1} parent=0 // pred_check_branch
    %27 = sbr.rel (0) target = $region21
  $region20: #{_er_mlp_forward_impl.1} parent=0 // pred_region
    _
  $region21: #{_er_mlp_forward_impl.1} parent=0 // pred_fallthru
    _
  // Predicated region
  $region22: #{_er_mlp_forward_impl.1} parent=0 // pred_check
    _
  $region23: #{_er_mlp_forward_impl.1} parent=0 // pred_check_branch
    %29 = sbr.rel (0) target = $region25
  $region24: #{_er_mlp_forward_impl.1} parent=0 // pred_region
    _
  $region25: #{_er_mlp_forward_impl.1} parent=0 // pred_fallthru
    _
  // Predicated region
  $region26: #{_er_mlp_forward_impl.1} parent=0 // pred_check
    _
  $region27: #{_er_mlp_forward_impl.1} parent=0 // pred_check_branch
    %31 = sbr.rel (0) target = $region29
  $region28: #{_er_mlp_forward_impl.1} parent=0 // pred_region
    _
  $region29: #{_er_mlp_forward_impl.1} parent=0 // pred_fallthru
    _
  // Predicated region
  $region30: #{_er_mlp_forward_impl.1} parent=0 // pred_check
    _
  $region31: #{_er_mlp_forward_impl.1} parent=0 // pred_check_branch
    %33 = sbr.rel (0) target = $region33
  $region32: #{_er_mlp_forward_impl.1} parent=0 // pred_region
    _
  $region33: #{_er_mlp_forward_impl.1} parent=0 // pred_fallthru
    _
  // Predicated region
  $region34: #{_er_mlp_forward_impl.1} parent=0 // pred_check
    _
  $region35: #{_er_mlp_forward_impl.1} parent=0 // pred_check_branch
    %35 = sbr.rel (0) target = $region37
  $region36: #{_er_mlp_forward_impl.1} parent=0 // pred_region
    _
  $region37: #{_er_mlp_forward_impl.1} parent=0 // pred_fallthru
    _
  // Predicated region
  $region38: #{_er_mlp_forward_impl.1} parent=0 // pred_check
    _
  $region39: #{_er_mlp_forward_impl.1} parent=0 // pred_check_branch
    %37 = sbr.rel (0) target = $region41
  $region40: #{_er_mlp_forward_impl.1} parent=0 // pred_region
    _
  $region41: #{_er_mlp_forward_impl.1} parent=0 // pred_fallthru
    _
  // Predicated region
  $region42: #{_er_mlp_forward_impl.1} parent=0 // pred_check
    _
  $region43: #{_er_mlp_forward_impl.1} parent=0 // pred_check_branch
    %39 = sbr.rel (0) target = $region45
  $region44: #{_er_mlp_forward_impl.1} parent=0 // pred_region
    _
  $region45: #{_er_mlp_forward_impl.1} parent=0 // pred_fallthru
    _
  // Predicated region
  $region46: #{_er_mlp_forward_impl.1} parent=0 // pred_check
    _
  $region47: #{_er_mlp_forward_impl.1} parent=0 // pred_check_branch
    %41 = sbr.rel (0) target = $region49
  $region48: #{_er_mlp_forward_impl.1} parent=0 // pred_region
    _
  $region49: #{_er_mlp_forward_impl.1} parent=0 // pred_fallthru
    _
  %v43 = vld [vmem:[%s0] sm:$0xff]
  %v44 = vld [vmem:[%s0 + $0x8] sm:$0xff]
  %v45 = vld [vmem:[%s0 + $0x10] sm:$0xff]
  %v46 = vld [vmem:[%s0 + $0x18] sm:$0xff]
  %v47 = vld [vmem:[%s0 + $0x20] sm:$0xff]
  %v48 = vld [vmem:[%s0 + $0x28] sm:$0xff]
  %v49 = vld [vmem:[%s0 + $0x30] sm:$0xff]
  %v50 = vld [vmem:[%s0 + $0x38] sm:$0xff]
  %v51 = vld [vmem:[%s0 + $0x40] sm:$0xff]
  %v52 = vld [vmem:[%s0 + $0x48] sm:$0xff]
  %v53 = vld [vmem:[%s0 + $0x50] sm:$0xff]
  %v54 = vld [vmem:[%s0 + $0x58] sm:$0xff]
  %v55 = vld [vmem:[%s0 + $0x60] sm:$0xff]
  %v56 = vld [vmem:[%s0 + $0x68] sm:$0xff]
  %v57 = vld [vmem:[%s0 + $0x70] sm:$0xff]
  %v58 = vld [vmem:[%s0 + $0x78] sm:$0xff]
  %v59 = vld [vmem:[%s3] sm:$0xf]
  %v60 = vld [vmem:[%s3 + $0x4] sm:$0xf]
  %v61 = vlaneseq
  %v62 = vand.u32 %v61, 127
  %63 = vset.pattern.permute.xlu0 0
  %64 = vperm.xlu0 %63, %v43
  %v65 = vpop.permute.xlu0 %64
  %66 = vset.pattern.permute.xlu0 0
  %67 = vperm.xlu0 %66, %v44
  %v68 = vpop.permute.xlu0 %67
  %69 = vset.pattern.permute.xlu0 0
  %70 = vperm.xlu0 %69, %v45
  %v71 = vpop.permute.xlu0 %70
  %72 = vset.pattern.permute.xlu0 0
  %73 = vperm.xlu0 %72, %v46
  %v74 = vpop.permute.xlu0 %73
  %75 = vset.pattern.permute.xlu0 0
  %76 = vperm.xlu0 %75, %v47
  %v77 = vpop.permute.xlu0 %76
  %78 = vset.pattern.permute.xlu0 0
  %79 = vperm.xlu0 %78, %v48
  %v80 = vpop.permute.xlu0 %79
  %81 = vset.pattern.permute.xlu0 0
  %82 = vperm.xlu0 %81, %v49
  %v83 = vpop.permute.xlu0 %82
  %84 = vset.pattern.permute.xlu0 0
  %85 = vperm.xlu0 %84, %v50
  %v86 = vpop.permute.xlu0 %85
  %87 = vset.pattern.permute.xlu0 0
  %88 = vperm.xlu0 %87, %v51
  %v89 = vpop.permute.xlu0 %88
  %90 = vset.pattern.permute.xlu0 0
  %91 = vperm.xlu0 %90, %v52
  %v92 = vpop.permute.xlu0 %91
  %93 = vset.pattern.permute.xlu0 0
  %94 = vperm.xlu0 %93, %v53
  %v95 = vpop.permute.xlu0 %94
  %96 = vset.pattern.permute.xlu0 0
  %97 = vperm.xlu0 %96, %v54
  %v98 = vpop.permute.xlu0 %97
  %99 = vset.pattern.permute.xlu0 0
  %100 = vperm.xlu0 %99, %v55
  %v101 = vpop.permute.xlu0 %100
  %102 = vset.pattern.permute.xlu0 0
  %103 = vperm.xlu0 %102, %v56
  %v104 = vpop.permute.xlu0 %103
  %105 = vset.pattern.permute.xlu0 0
  %106 = vperm.xlu0 %105, %v57
  %v107 = vpop.permute.xlu0 %106
  %108 = vset.pattern.permute.xlu0 0
  %109 = vperm.xlu0 %108, %v58
  %v110 = vpop.permute.xlu0 %109
  %vm111 = vcmp.eq.s32.totalorder %v62, %v65
  %vm112 = vcmp.eq.s32.totalorder %v62, %v68
  %vm113 = vcmp.eq.s32.totalorder %v62, %v71
  %vm114 = vcmp.eq.s32.totalorder %v62, %v74
  %vm115 = vcmp.eq.s32.totalorder %v62, %v77
  %vm116 = vcmp.eq.s32.totalorder %v62, %v80
  %vm117 = vcmp.eq.s32.totalorder %v62, %v83
  %vm118 = vcmp.eq.s32.totalorder %v62, %v86
  %vm119 = vcmp.eq.s32.totalorder %v62, %v89
  %vm120 = vcmp.eq.s32.totalorder %v62, %v92
  %vm121 = vcmp.eq.s32.totalorder %v62, %v95
  %vm122 = vcmp.eq.s32.totalorder %v62, %v98
  %vm123 = vcmp.eq.s32.totalorder %v62, %v101
  %vm124 = vcmp.eq.s32.totalorder %v62, %v104
  %vm125 = vcmp.eq.s32.totalorder %v62, %v107
  %vm126 = vcmp.eq.s32.totalorder %v62, %v110
  %v127 = vsel %vm111, 1, 0
  %v128 = vsel %vm112, 1, 0
  %v129 = vsel %vm113, 1, 0
  %v130 = vsel %vm114, 1, 0
  %v131 = vsel %vm115, 1, 0
  %v132 = vsel %vm116, 1, 0
  %v133 = vsel %vm117, 1, 0
  %v134 = vsel %vm118, 1, 0
  %v135 = vsel %vm119, 1, 0
  %v136 = vsel %vm120, 1, 0
  %v137 = vsel %vm121, 1, 0
  %v138 = vsel %vm122, 1, 0
  %v139 = vsel %vm123, 1, 0
  %v140 = vsel %vm124, 1, 0
  %v141 = vsel %vm125, 1, 0
  %v142 = vsel %vm126, 1, 0
  %v143 = vcvt.s32.f32 %v127
  %v144 = vcvt.s32.f32 %v128
  %v145 = vcvt.s32.f32 %v129
  %v146 = vcvt.s32.f32 %v130
  %v147 = vcvt.s32.f32 %v131
  %v148 = vcvt.s32.f32 %v132
  %v149 = vcvt.s32.f32 %v133
  %v150 = vcvt.s32.f32 %v134
  %v151 = vcvt.s32.f32 %v135
  %v152 = vcvt.s32.f32 %v136
  %v153 = vcvt.s32.f32 %v137
  %v154 = vcvt.s32.f32 %v138
  %v155 = vcvt.s32.f32 %v139
  %v156 = vcvt.s32.f32 %v140
  %v157 = vcvt.s32.f32 %v141
  %v158 = vcvt.s32.f32 %v142
  %v159 = vpack.c.bf16 %v144, %v143
  %v160 = vpack.c.bf16 %v146, %v145
  %v161 = vpack.c.bf16 %v148, %v147
  %v162 = vpack.c.bf16 %v150, %v149
  %v163 = vpack.c.bf16 %v152, %v151
  %v164 = vpack.c.bf16 %v154, %v153
  %v165 = vpack.c.bf16 %v156, %v155
  %v166 = vpack.c.bf16 %v158, %v157
  %v169 = vunpack.c.l.b16 %v59
  %v170 = vunpack.c.l.b16 %v60
  %v171 = vpack.c.b16 %v170, %v169
  %vm173 = vcmask 130048
  %v175 = vsel %vm173, %v159, 0
  %v178 = vsel %vm173, %v160, 0
  %v181 = vsel %vm173, %v161, 0
  %v184 = vsel %vm173, %v162, 0
  %v187 = vsel %vm173, %v163, 0
  %v190 = vsel %vm173, %v164, 0
  %v193 = vsel %vm173, %v165, 0
  %v196 = vsel %vm173, %v166, 0
  %198 = vmatprep.subr.bf16.mxu0 0
  %199 = vmatpush1.bf16.msra.mxu0 %v171
  %200 = vmatprep.subr.bf16.mxu0 0
  %201 = vmatpush1.bf16.msra.mxu0 0
  %202 = vmatprep.subr.bf16.mxu0 0
  %203 = vmatpush1.bf16.msra.mxu0 0
  %204 = vmatprep.subr.bf16.mxu0 0
  %205 = vmatpush1.bf16.msra.mxu0 0
  %206 = vmatprep.subr.bf16.mxu0 0
  %207 = vmatpush1.bf16.msra.mxu0 0
  %208 = vmatprep.subr.bf16.mxu0 0
  %209 = vmatpush1.bf16.msra.mxu0 0
  %210 = vmatprep.subr.bf16.mxu0 0
  %211 = vmatpush1.bf16.msra.mxu0 0
  %212 = vmatprep.subr.bf16.mxu0 0
  %213 = vmatpush1.bf16.msra.mxu0 0
  %214 = vmatprep.subr.bf16.mxu0 0
  %215 = vmatpush1.bf16.msra.mxu0 0
  %216 = vmatprep.subr.bf16.mxu0 0
  %217 = vmatpush1.bf16.msra.mxu0 0
  %218 = vmatprep.subr.bf16.mxu0 0
  %219 = vmatpush1.bf16.msra.mxu0 0
  %220 = vmatprep.subr.bf16.mxu0 0
  %221 = vmatpush1.bf16.msra.mxu0 0
  %222 = vmatprep.subr.bf16.mxu0 0
  %223 = vmatpush1.bf16.msra.mxu0 0
  %224 = vmatprep.subr.bf16.mxu0 0
  %225 = vmatpush1.bf16.msra.mxu0 0
  %226 = vmatprep.subr.bf16.mxu0 0
  %227 = vmatpush1.bf16.msra.mxu0 0
  %228 = vmatprep.subr.bf16.mxu0 0
  %229 = vmatpush1.bf16.msra.mxu0 0
  %230 = vmatprep.mubr.bf16.mxu0 0
  %231 = vmatmul.mubr.bf16.gmra.mrb[0].mxu0 %v175
  %v232 = vpop.f32.mrb[0].mxu0
  %v233 = vadd.f32 0.0, %v232
  %v234 = vpop.f32.mrb[0].mxu0
  %v235 = vpop.f32.mrb[0].mxu0
  %v236 = vadd.f32 0.0, %v235
  %v237 = vpop.f32.mrb[0].mxu0
  %238 = vmatprep.mubr.bf16.mxu0 0
  %239 = vmatmul.mubr.bf16.gmra.mrb[0].mxu0 %v178
  %v240 = vpop.f32.mrb[0].mxu0
  %v241 = vadd.f32 0.0, %v240
  %v242 = vpop.f32.mrb[0].mxu0
  %v243 = vpop.f32.mrb[0].mxu0
  %v244 = vadd.f32 0.0, %v243
  %v245 = vpop.f32.mrb[0].mxu0
  %246 = vmatprep.mubr.bf16.mxu0 0
  %247 = vmatmul.mubr.bf16.gmra.mrb[0].mxu0 %v181
  %v248 = vpop.f32.mrb[0].mxu0
  %v249 = vadd.f32 0.0, %v248
  %v250 = vpop.f32.mrb[0].mxu0
  %v251 = vpop.f32.mrb[0].mxu0
  %v252 = vadd.f32 0.0, %v251
  %v253 = vpop.f32.mrb[0].mxu0
  %254 = vmatprep.mubr.bf16.mxu0 0
  %255 = vmatmul.mubr.bf16.gmra.mrb[0].mxu0 %v184
  %v256 = vpop.f32.mrb[0].mxu0
  %v257 = vadd.f32 0.0, %v256
  %v258 = vpop.f32.mrb[0].mxu0
  %v259 = vpop.f32.mrb[0].mxu0
  %v260 = vadd.f32 0.0, %v259
  %v261 = vpop.f32.mrb[0].mxu0
  %262 = vmatprep.mubr.bf16.mxu0 0
  %263 = vmatmul.mubr.bf16.gmra.mrb[0].mxu0 %v187
  %v264 = vpop.f32.mrb[0].mxu0
  %v265 = vadd.f32 0.0, %v264
  %v266 = vpop.f32.mrb[0].mxu0
  %v267 = vpop.f32.mrb[0].mxu0
  %v268 = vadd.f32 0.0, %v267
  %v269 = vpop.f32.mrb[0].mxu0
  %270 = vmatprep.mubr.bf16.mxu0 0
  %271 = vmatmul.mubr.bf16.gmra.mrb[0].mxu0 %v190
  %v272 = vpop.f32.mrb[0].mxu0
  %v273 = vadd.f32 0.0, %v272
  %v274 = vpop.f32.mrb[0].mxu0
  %v275 = vpop.f32.mrb[0].mxu0
  %v276 = vadd.f32 0.0, %v275
  %v277 = vpop.f32.mrb[0].mxu0
  %278 = vmatprep.mubr.bf16.mxu0 0
  %279 = vmatmul.mubr.bf16.gmra.mrb[0].mxu0 %v193
  %v280 = vpop.f32.mrb[0].mxu0
  %v281 = vadd.f32 0.0, %v280
  %v282 = vpop.f32.mrb[0].mxu0
  %v283 = vpop.f32.mrb[0].mxu0
  %v284 = vadd.f32 0.0, %v283
  %v285 = vpop.f32.mrb[0].mxu0
  %286 = vmatprep.mubr.bf16.mxu0 0
  %287 = vmatmul.mubr.bf16.gmra.mrb[0].mxu0 %v196
  %v288 = vpop.f32.mrb[0].mxu0
  %v289 = vadd.f32 0.0, %v288
  %v290 = vpop.f32.mrb[0].mxu0
  %v291 = vpop.f32.mrb[0].mxu0
  %v292 = vadd.f32 0.0, %v291
  %v293 = vpop.f32.mrb[0].mxu0
  %294 = vdwg.mxu0
  %v295 = vpack.c.bf16 %v236, %v233
  %v296 = vpack.c.bf16 %v244, %v241
  %v297 = vpack.c.bf16 %v252, %v249
  %v298 = vpack.c.bf16 %v260, %v257
  %v299 = vpack.c.bf16 %v268, %v265
  %v300 = vpack.c.bf16 %v276, %v273
  %v301 = vpack.c.bf16 %v284, %v281
  %v302 = vpack.c.bf16 %v292, %v289
  %v303 = vld [vmem:[%s1] sm:$0xff]
  %v304 = vld [vmem:[%s1 + $0x8] sm:$0xff]
  %v305 = vld [vmem:[%s1 + $0x10] sm:$0xff]
  %v306 = vld [vmem:[%s1 + $0x18] sm:$0xff]
  %v307 = vld [vmem:[%s1 + $0x20] sm:$0xff]
  %v308 = vld [vmem:[%s1 + $0x28] sm:$0xff]
  %v309 = vld [vmem:[%s1 + $0x30] sm:$0xff]
  %v310 = vld [vmem:[%s1 + $0x38] sm:$0xff]
  %v311 = vld [vmem:[%s1 + $0x40] sm:$0xff]
  %v312 = vld [vmem:[%s1 + $0x48] sm:$0xff]
  %v313 = vld [vmem:[%s1 + $0x50] sm:$0xff]
  %v314 = vld [vmem:[%s1 + $0x58] sm:$0xff]
  %v315 = vld [vmem:[%s1 + $0x60] sm:$0xff]
  %v316 = vld [vmem:[%s1 + $0x68] sm:$0xff]
  %v317 = vld [vmem:[%s1 + $0x70] sm:$0xff]
  %v318 = vld [vmem:[%s1 + $0x78] sm:$0xff]
  %v319 = vld [vmem:[%s4] sm:$0xf]
  %320 = vset.pattern.permute.xlu0 0
  %321 = vperm.xlu0 %320, %v303
  %v322 = vpop.permute.xlu0 %321
  %323 = vset.pattern.permute.xlu0 0
  %324 = vperm.xlu0 %323, %v304
  %v325 = vpop.permute.xlu0 %324
  %326 = vset.pattern.permute.xlu0 0
  %327 = vperm.xlu0 %326, %v305
  %v328 = vpop.permute.xlu0 %327
  %329 = vset.pattern.permute.xlu0 0
  %330 = vperm.xlu0 %329, %v306
  %v331 = vpop.permute.xlu0 %330
  %332 = vset.pattern.permute.xlu0 0
  %333 = vperm.xlu0 %332, %v307
  %v334 = vpop.permute.xlu0 %333
  %335 = vset.pattern.permute.xlu0 0
  %336 = vperm.xlu0 %335, %v308
  %v337 = vpop.permute.xlu0 %336
  %338 = vset.pattern.permute.xlu0 0
  %339 = vperm.xlu0 %338, %v309
  %v340 = vpop.permute.xlu0 %339
  %341 = vset.pattern.permute.xlu0 0
  %342 = vperm.xlu0 %341, %v310
  %v343 = vpop.permute.xlu0 %342
  %344 = vset.pattern.permute.xlu0 0
  %345 = vperm.xlu0 %344, %v311
  %v346 = vpop.permute.xlu0 %345
  %347 = vset.pattern.permute.xlu0 0
  %348 = vperm.xlu0 %347, %v312
  %v349 = vpop.permute.xlu0 %348
  %350 = vset.pattern.permute.xlu0 0
  %351 = vperm.xlu0 %350, %v313
  %v352 = vpop.permute.xlu0 %351
  %353 = vset.pattern.permute.xlu0 0
  %354 = vperm.xlu0 %353, %v314
  %v355 = vpop.permute.xlu0 %354
  %356 = vset.pattern.permute.xlu0 0
  %357 = vperm.xlu0 %356, %v315
  %v358 = vpop.permute.xlu0 %357
  %359 = vset.pattern.permute.xlu0 0
  %360 = vperm.xlu0 %359, %v316
  %v361 = vpop.permute.xlu0 %360
  %362 = vset.pattern.permute.xlu0 0
  %363 = vperm.xlu0 %362, %v317
  %v364 = vpop.permute.xlu0 %363
  %365 = vset.pattern.permute.xlu0 0
  %366 = vperm.xlu0 %365, %v318
  %v367 = vpop.permute.xlu0 %366
  %vm368 = vcmp.eq.s32.totalorder %v62, %v322
  %vm369 = vcmp.eq.s32.totalorder %v62, %v325
  %vm370 = vcmp.eq.s32.totalorder %v62, %v328
  %vm371 = vcmp.eq.s32.totalorder %v62, %v331
  %vm372 = vcmp.eq.s32.totalorder %v62, %v334
  %vm373 = vcmp.eq.s32.totalorder %v62, %v337
  %vm374 = vcmp.eq.s32.totalorder %v62, %v340
  %vm375 = vcmp.eq.s32.totalorder %v62, %v343
  %vm376 = vcmp.eq.s32.totalorder %v62, %v346
  %vm377 = vcmp.eq.s32.totalorder %v62, %v349
  %vm378 = vcmp.eq.s32.totalorder %v62, %v352
  %vm379 = vcmp.eq.s32.totalorder %v62, %v355
  %vm380 = vcmp.eq.s32.totalorder %v62, %v358
  %vm381 = vcmp.eq.s32.totalorder %v62, %v361
  %vm382 = vcmp.eq.s32.totalorder %v62, %v364
  %vm383 = vcmp.eq.s32.totalorder %v62, %v367
  %v384 = vsel %vm368, 1, 0
  %v385 = vsel %vm369, 1, 0
  %v386 = vsel %vm370, 1, 0
  %v387 = vsel %vm371, 1, 0
  %v388 = vsel %vm372, 1, 0
  %v389 = vsel %vm373, 1, 0
  %v390 = vsel %vm374, 1, 0
  %v391 = vsel %vm375, 1, 0
  %v392 = vsel %vm376, 1, 0
  %v393 = vsel %vm377, 1, 0
  %v394 = vsel %vm378, 1, 0
  %v395 = vsel %vm379, 1, 0
  %v396 = vsel %vm380, 1, 0
  %v397 = vsel %vm381, 1, 0
  %v398 = vsel %vm382, 1, 0
  %v399 = vsel %vm383, 1, 0
  %v400 = vcvt.s32.f32 %v384
  %v401 = vcvt.s32.f32 %v385
  %v402 = vcvt.s32.f32 %v386
  %v403 = vcvt.s32.f32 %v387
  %v404 = vcvt.s32.f32 %v388
  %v405 = vcvt.s32.f32 %v389
  %v406 = vcvt.s32.f32 %v390
  %v407 = vcvt.s32.f32 %v391
  %v408 = vcvt.s32.f32 %v392
  %v409 = vcvt.s32.f32 %v393
  %v410 = vcvt.s32.f32 %v394
  %v411 = vcvt.s32.f32 %v395
  %v412 = vcvt.s32.f32 %v396
  %v413 = vcvt.s32.f32 %v397
  %v414 = vcvt.s32.f32 %v398
  %v415 = vcvt.s32.f32 %v399
  %v416 = vpack.c.bf16 %v401, %v400
  %v417 = vpack.c.bf16 %v403, %v402
  %v418 = vpack.c.bf16 %v405, %v404
  %v419 = vpack.c.bf16 %v407, %v406
  %v420 = vpack.c.bf16 %v409, %v408
  %v421 = vpack.c.bf16 %v411, %v410
  %v422 = vpack.c.bf16 %v413, %v412
  %v423 = vpack.c.bf16 %v415, %v414
  %vm424 = vcmask 64512
  %v426 = vsel %vm424, %v416, 0
  %v429 = vsel %vm424, %v417, 0
  %v432 = vsel %vm424, %v418, 0
  %v435 = vsel %vm424, %v419, 0
  %v438 = vsel %vm424, %v420, 0
  %v441 = vsel %vm424, %v421, 0
  %v444 = vsel %vm424, %v422, 0
  %v447 = vsel %vm424, %v423, 0
  %vm449 = vcmask 1043456
  %v451 = vsel %vm449, %v319, 0
  %453 = vmatprep.subr.bf16.mxu0 0
  %454 = vmatpush1.bf16.msra.mxu0 %v451
  %455 = vmatprep.subr.bf16.mxu0 0
  %456 = vmatpush1.bf16.msra.mxu0 0
  %457 = vmatprep.subr.bf16.mxu0 0
  %458 = vmatpush1.bf16.msra.mxu0 0
  %459 = vmatprep.subr.bf16.mxu0 0
  %460 = vmatpush1.bf16.msra.mxu0 0
  %461 = vmatprep.subr.bf16.mxu0 0
  %462 = vmatpush1.bf16.msra.mxu0 0
  %463 = vmatprep.subr.bf16.mxu0 0
  %464 = vmatpush1.bf16.msra.mxu0 0
  %465 = vmatprep.subr.bf16.mxu0 0
  %466 = vmatpush1.bf16.msra.mxu0 0
  %467 = vmatprep.subr.bf16.mxu0 0
  %468 = vmatpush1.bf16.msra.mxu0 0
  %469 = vmatprep.subr.bf16.mxu0 0
  %470 = vmatpush1.bf16.msra.mxu0 0
  %471 = vmatprep.subr.bf16.mxu0 0
  %472 = vmatpush1.bf16.msra.mxu0 0
  %473 = vmatprep.subr.bf16.mxu0 0
  %474 = vmatpush1.bf16.msra.mxu0 0
  %475 = vmatprep.subr.bf16.mxu0 0
  %476 = vmatpush1.bf16.msra.mxu0 0
  %477 = vmatprep.subr.bf16.mxu0 0
  %478 = vmatpush1.bf16.msra.mxu0 0
  %479 = vmatprep.subr.bf16.mxu0 0
  %480 = vmatpush1.bf16.msra.mxu0 0
  %481 = vmatprep.subr.bf16.mxu0 0
  %482 = vmatpush1.bf16.msra.mxu0 0
  %483 = vmatprep.subr.bf16.mxu0 0
  %484 = vmatpush1.bf16.msra.mxu0 0
  %485 = vmatprep.mubr.bf16.mxu0 0
  %486 = vmatmul.mubr.bf16.gmra.mrb[0].mxu0 %v426
  %v487 = vpop.f32.mrb[0].mxu0
  %v488 = vadd.f32 0.0, %v487
  %v489 = vpop.f32.mrb[0].mxu0
  %v490 = vpop.f32.mrb[0].mxu0
  %v491 = vadd.f32 0.0, %v490
  %v492 = vpop.f32.mrb[0].mxu0
  %493 = vmatprep.mubr.bf16.mxu0 0
  %494 = vmatmul.mubr.bf16.gmra.mrb[0].mxu0 %v429
  %v495 = vpop.f32.mrb[0].mxu0
  %v496 = vadd.f32 0.0, %v495
  %v497 = vpop.f32.mrb[0].mxu0
  %v498 = vpop.f32.mrb[0].mxu0
  %v499 = vadd.f32 0.0, %v498
  %v500 = vpop.f32.mrb[0].mxu0
  %501 = vmatprep.mubr.bf16.mxu0 0
  %502 = vmatmul.mubr.bf16.gmra.mrb[0].mxu0 %v432
  %v503 = vpop.f32.mrb[0].mxu0
  %v504 = vadd.f32 0.0, %v503
  %v505 = vpop.f32.mrb[0].mxu0
  %v506 = vpop.f32.mrb[0].mxu0
  %v507 = vadd.f32 0.0, %v506
  %v508 = vpop.f32.mrb[0].mxu0
  %509 = vmatprep.mubr.bf16.mxu0 0
  %510 = vmatmul.mubr.bf16.gmra.mrb[0].mxu0 %v435
  %v511 = vpop.f32.mrb[0].mxu0
  %v512 = vadd.f32 0.0, %v511
  %v513 = vpop.f32.mrb[0].mxu0
  %v514 = vpop.f32.mrb[0].mxu0
  %v515 = vadd.f32 0.0, %v514
  %v516 = vpop.f32.mrb[0].mxu0
  %517 = vmatprep.mubr.bf16.mxu0 0
  %518 = vmatmul.mubr.bf16.gmra.mrb[0].mxu0 %v438
  %v519 = vpop.f32.mrb[0].mxu0
  %v520 = vadd.f32 0.0, %v519
  %v521 = vpop.f32.mrb[0].mxu0
  %v522 = vpop.f32.mrb[0].mxu0
  %v523 = vadd.f32 0.0, %v522
  %v524 = vpop.f32.mrb[0].mxu0
  %525 = vmatprep.mubr.bf16.mxu0 0
  %526 = vmatmul.mubr.bf16.gmra.mrb[0].mxu0 %v441
  %v527 = vpop.f32.mrb[0].mxu0
  %v528 = vadd.f32 0.0, %v527
  %v529 = vpop.f32.mrb[0].mxu0
  %v530 = vpop.f32.mrb[0].mxu0
  %v531 = vadd.f32 0.0, %v530
  %v532 = vpop.f32.mrb[0].mxu0
  %533 = vmatprep.mubr.bf16.mxu0 0
  %534 = vmatmul.mubr.bf16.gmra.mrb[0].mxu0 %v444
  %v535 = vpop.f32.mrb[0].mxu0
  %v536 = vadd.f32 0.0, %v535
  %v537 = vpop.f32.mrb[0].mxu0
  %v538 = vpop.f32.mrb[0].mxu0
  %v539 = vadd.f32 0.0, %v538
  %v540 = vpop.f32.mrb[0].mxu0
  %541 = vmatprep.mubr.bf16.mxu0 0
  %542 = vmatmul.mubr.bf16.gmra.mrb[0].mxu0 %v447
  %v543 = vpop.f32.mrb[0].mxu0
  %v544 = vadd.f32 0.0, %v543
  %v545 = vpop.f32.mrb[0].mxu0
  %v546 = vpop.f32.mrb[0].mxu0
  %v547 = vadd.f32 0.0, %v546
  %v548 = vpop.f32.mrb[0].mxu0
  %549 = vdwg.mxu0
  %v550 = vpack.c.bf16 %v491, %v488
  %v551 = vpack.c.bf16 %v499, %v496
  %v552 = vpack.c.bf16 %v507, %v504
  %v553 = vpack.c.bf16 %v515, %v512
  %v554 = vpack.c.bf16 %v523, %v520
  %v555 = vpack.c.bf16 %v531, %v528
  %v556 = vpack.c.bf16 %v539, %v536
  %v557 = vpack.c.bf16 %v547, %v544
  %v558 = vld [vmem:[%s2] sm:$0xff]
  %v559 = vld [vmem:[%s2 + $0x8] sm:$0xff]
  %v560 = vld [vmem:[%s2 + $0x10] sm:$0xff]
  %v561 = vld [vmem:[%s2 + $0x18] sm:$0xff]
  %v562 = vld [vmem:[%s2 + $0x20] sm:$0xff]
  %v563 = vld [vmem:[%s2 + $0x28] sm:$0xff]
  %v564 = vld [vmem:[%s2 + $0x30] sm:$0xff]
  %v565 = vld [vmem:[%s2 + $0x38] sm:$0xff]
  %v566 = vld [vmem:[%s2 + $0x40] sm:$0xff]
  %v567 = vld [vmem:[%s2 + $0x48] sm:$0xff]
  %v568 = vld [vmem:[%s2 + $0x50] sm:$0xff]
  %v569 = vld [vmem:[%s2 + $0x58] sm:$0xff]
  %v570 = vld [vmem:[%s2 + $0x60] sm:$0xff]
  %v571 = vld [vmem:[%s2 + $0x68] sm:$0xff]
  %v572 = vld [vmem:[%s2 + $0x70] sm:$0xff]
  %v573 = vld [vmem:[%s2 + $0x78] sm:$0xff]
  %574 = vset.pattern.permute.xlu0 0
  %575 = vperm.xlu0 %574, %v558
  %v576 = vpop.permute.xlu0 %575
  %577 = vset.pattern.permute.xlu0 0
  %578 = vperm.xlu0 %577, %v559
  %v579 = vpop.permute.xlu0 %578
  %580 = vset.pattern.permute.xlu0 0
  %581 = vperm.xlu0 %580, %v560
  %v582 = vpop.permute.xlu0 %581
  %583 = vset.pattern.permute.xlu0 0
  %584 = vperm.xlu0 %583, %v561
  %v585 = vpop.permute.xlu0 %584
  %586 = vset.pattern.permute.xlu0 0
  %587 = vperm.xlu0 %586, %v562
  %v588 = vpop.permute.xlu0 %587
  %589 = vset.pattern.permute.xlu0 0
  %590 = vperm.xlu0 %589, %v563
  %v591 = vpop.permute.xlu0 %590
  %592 = vset.pattern.permute.xlu0 0
  %593 = vperm.xlu0 %592, %v564
  %v594 = vpop.permute.xlu0 %593
  %595 = vset.pattern.permute.xlu0 0
  %596 = vperm.xlu0 %595, %v565
  %v597 = vpop.permute.xlu0 %596
  %598 = vset.pattern.permute.xlu0 0
  %599 = vperm.xlu0 %598, %v566
  %v600 = vpop.permute.xlu0 %599
  %601 = vset.pattern.permute.xlu0 0
  %602 = vperm.xlu0 %601, %v567
  %v603 = vpop.permute.xlu0 %602
  %604 = vset.pattern.permute.xlu0 0
  %605 = vperm.xlu0 %604, %v568
  %v606 = vpop.permute.xlu0 %605
  %607 = vset.pattern.permute.xlu0 0
  %608 = vperm.xlu0 %607, %v569
  %v609 = vpop.permute.xlu0 %608
  %610 = vset.pattern.permute.xlu0 0
  %611 = vperm.xlu0 %610, %v570
  %v612 = vpop.permute.xlu0 %611
  %613 = vset.pattern.permute.xlu0 0
  %614 = vperm.xlu0 %613, %v571
  %v615 = vpop.permute.xlu0 %614
  %616 = vset.pattern.permute.xlu0 0
  %617 = vperm.xlu0 %616, %v572
  %v618 = vpop.permute.xlu0 %617
  %619 = vset.pattern.permute.xlu0 0
  %620 = vperm.xlu0 %619, %v573
  %v621 = vpop.permute.xlu0 %620
  %vm622 = vcmp.eq.s32.totalorder %v62, %v576
  %vm623 = vcmp.eq.s32.totalorder %v62, %v579
  %vm624 = vcmp.eq.s32.totalorder %v62, %v582
  %vm625 = vcmp.eq.s32.totalorder %v62, %v585
  %vm626 = vcmp.eq.s32.totalorder %v62, %v588
  %vm627 = vcmp.eq.s32.totalorder %v62, %v591
  %vm628 = vcmp.eq.s32.totalorder %v62, %v594
  %vm629 = vcmp.eq.s32.totalorder %v62, %v597
  %vm630 = vcmp.eq.s32.totalorder %v62, %v600
  %vm631 = vcmp.eq.s32.totalorder %v62, %v603
  %vm632 = vcmp.eq.s32.totalorder %v62, %v606
  %vm633 = vcmp.eq.s32.totalorder %v62, %v609
  %vm634 = vcmp.eq.s32.totalorder %v62, %v612
  %vm635 = vcmp.eq.s32.totalorder %v62, %v615
  %vm636 = vcmp.eq.s32.totalorder %v62, %v618
  %vm637 = vcmp.eq.s32.totalorder %v62, %v621
  %v638 = vsel %vm622, 1, 0
  %v639 = vsel %vm623, 1, 0
  %v640 = vsel %vm624, 1, 0
  %v641 = vsel %vm625, 1, 0
  %v642 = vsel %vm626, 1, 0
  %v643 = vsel %vm627, 1, 0
  %v644 = vsel %vm628, 1, 0
  %v645 = vsel %vm629, 1, 0
  %v646 = vsel %vm630, 1, 0
  %v647 = vsel %vm631, 1, 0
  %v648 = vsel %vm632, 1, 0
  %v649 = vsel %vm633, 1, 0
  %v650 = vsel %vm634, 1, 0
  %v651 = vsel %vm635, 1, 0
  %v652 = vsel %vm636, 1, 0
  %v653 = vsel %vm637, 1, 0
  %v654 = vcvt.s32.f32 %v638
  %v655 = vcvt.s32.f32 %v639
  %v656 = vcvt.s32.f32 %v640
  %v657 = vcvt.s32.f32 %v641
  %v658 = vcvt.s32.f32 %v642
  %v659 = vcvt.s32.f32 %v643
  %v660 = vcvt.s32.f32 %v644
  %v661 = vcvt.s32.f32 %v645
  %v662 = vcvt.s32.f32 %v646
  %v663 = vcvt.s32.f32 %v647
  %v664 = vcvt.s32.f32 %v648
  %v665 = vcvt.s32.f32 %v649
  %v666 = vcvt.s32.f32 %v650
  %v667 = vcvt.s32.f32 %v651
  %v668 = vcvt.s32.f32 %v652
  %v669 = vcvt.s32.f32 %v653
  %v670 = vpack.c.bf16 %v655, %v654
  %v671 = vpack.c.bf16 %v657, %v656
  %v672 = vpack.c.bf16 %v659, %v658
  %v673 = vpack.c.bf16 %v661, %v660
  %v674 = vpack.c.bf16 %v663, %v662
  %v675 = vpack.c.bf16 %v665, %v664
  %v676 = vpack.c.bf16 %v667, %v666
  %v677 = vpack.c.bf16 %v669, %v668
  %v679 = vsel %vm173, %v670, 0
  %v682 = vsel %vm173, %v671, 0
  %v685 = vsel %vm173, %v672, 0
  %v688 = vsel %vm173, %v673, 0
  %v691 = vsel %vm173, %v674, 0
  %v694 = vsel %vm173, %v675, 0
  %v697 = vsel %vm173, %v676, 0
  %v700 = vsel %vm173, %v677, 0
  %702 = vmatprep.subr.bf16.mxu0 0
  %703 = vmatpush1.bf16.msra.mxu0 %v171
  %704 = vmatprep.subr.bf16.mxu0 0
  %705 = vmatpush1.bf16.msra.mxu0 0
  %706 = vmatprep.subr.bf16.mxu0 0
  %707 = vmatpush1.bf16.msra.mxu0 0
  %708 = vmatprep.subr.bf16.mxu0 0
  %709 = vmatpush1.bf16.msra.mxu0 0
  %710 = vmatprep.subr.bf16.mxu0 0
  %711 = vmatpush1.bf16.msra.mxu0 0
  %712 = vmatprep.subr.bf16.mxu0 0
  %713 = vmatpush1.bf16.msra.mxu0 0
  %714 = vmatprep.subr.bf16.mxu0 0
  %715 = vmatpush1.bf16.msra.mxu0 0
  %716 = vmatprep.subr.bf16.mxu0 0
  %717 = vmatpush1.bf16.msra.mxu0 0
  %718 = vmatprep.subr.bf16.mxu0 0
  %719 = vmatpush1.bf16.msra.mxu0 0
  %720 = vmatprep.subr.bf16.mxu0 0
  %721 = vmatpush1.bf16.msra.mxu0 0
  %722 = vmatprep.subr.bf16.mxu0 0
  %723 = vmatpush1.bf16.msra.mxu0 0
  %724 = vmatprep.subr.bf16.mxu0 0
  %725 = vmatpush1.bf16.msra.mxu0 0
  %726 = vmatprep.subr.bf16.mxu0 0
  %727 = vmatpush1.bf16.msra.mxu0 0
  %728 = vmatprep.subr.bf16.mxu0 0
  %729 = vmatpush1.bf16.msra.mxu0 0
  %730 = vmatprep.subr.bf16.mxu0 0
  %731 = vmatpush1.bf16.msra.mxu0 0
  %732 = vmatprep.subr.bf16.mxu0 0
  %733 = vmatpush1.bf16.msra.mxu0 0
  %734 = vmatprep.mubr.bf16.mxu0 0
  %735 = vmatmul.mubr.bf16.gmra.mrb[0].mxu0 %v679
  %v736 = vpop.f32.mrb[0].mxu0
  %v737 = vadd.f32 0.0, %v736
  %v738 = vpop.f32.mrb[0].mxu0
  %v739 = vpop.f32.mrb[0].mxu0
  %v740 = vadd.f32 0.0, %v739
  %v741 = vpop.f32.mrb[0].mxu0
  %742 = vmatprep.mubr.bf16.mxu0 0
  %743 = vmatmul.mubr.bf16.gmra.mrb[0].mxu0 %v682
  %v744 = vpop.f32.mrb[0].mxu0
  %v745 = vadd.f32 0.0, %v744
  %v746 = vpop.f32.mrb[0].mxu0
  %v747 = vpop.f32.mrb[0].mxu0
  %v748 = vadd.f32 0.0, %v747
  %v749 = vpop.f32.mrb[0].mxu0
  %750 = vmatprep.mubr.bf16.mxu0 0
  %751 = vmatmul.mubr.bf16.gmra.mrb[0].mxu0 %v685
  %v752 = vpop.f32.mrb[0].mxu0
  %v753 = vadd.f32 0.0, %v752
  %v754 = vpop.f32.mrb[0].mxu0
  %v755 = vpop.f32.mrb[0].mxu0
  %v756 = vadd.f32 0.0, %v755
  %v757 = vpop.f32.mrb[0].mxu0
  %758 = vmatprep.mubr.bf16.mxu0 0
  %759 = vmatmul.mubr.bf16.gmra.mrb[0].mxu0 %v688
  %v760 = vpop.f32.mrb[0].mxu0
  %v761 = vadd.f32 0.0, %v760
  %v762 = vpop.f32.mrb[0].mxu0
  %v763 = vpop.f32.mrb[0].mxu0
  %v764 = vadd.f32 0.0, %v763
  %v765 = vpop.f32.mrb[0].mxu0
  %766 = vmatprep.mubr.bf16.mxu0 0
  %767 = vmatmul.mubr.bf16.gmra.mrb[0].mxu0 %v691
  %v768 = vpop.f32.mrb[0].mxu0
  %v769 = vadd.f32 0.0, %v768
  %v770 = vpop.f32.mrb[0].mxu0
  %v771 = vpop.f32.mrb[0].mxu0
  %v772 = vadd.f32 0.0, %v771
  %v773 = vpop.f32.mrb[0].mxu0
  %774 = vmatprep.mubr.bf16.mxu0 0
  %775 = vmatmul.mubr.bf16.gmra.mrb[0].mxu0 %v694
  %v776 = vpop.f32.mrb[0].mxu0
  %v777 = vadd.f32 0.0, %v776
  %v778 = vpop.f32.mrb[0].mxu0
  %v779 = vpop.f32.mrb[0].mxu0
  %v780 = vadd.f32 0.0, %v779
  %v781 = vpop.f32.mrb[0].mxu0
  %782 = vmatprep.mubr.bf16.mxu0 0
  %783 = vmatmul.mubr.bf16.gmra.mrb[0].mxu0 %v697
  %v784 = vpop.f32.mrb[0].mxu0
  %v785 = vadd.f32 0.0, %v784
  %v786 = vpop.f32.mrb[0].mxu0
  %v787 = vpop.f32.mrb[0].mxu0
  %v788 = vadd.f32 0.0, %v787
  %v789 = vpop.f32.mrb[0].mxu0
  %790 = vmatprep.mubr.bf16.mxu0 0
  %791 = vmatmul.mubr.bf16.gmra.mrb[0].mxu0 %v700
  %v792 = vpop.f32.mrb[0].mxu0
  %v793 = vadd.f32 0.0, %v792
  %v794 = vpop.f32.mrb[0].mxu0
  %v795 = vpop.f32.mrb[0].mxu0
  %v796 = vadd.f32 0.0, %v795
  %v797 = vpop.f32.mrb[0].mxu0
  %798 = vdwg.mxu0
  %v799 = vpack.c.bf16 %v740, %v737
  %v800 = vpack.c.bf16 %v748, %v745
  %v801 = vpack.c.bf16 %v756, %v753
  %v802 = vpack.c.bf16 %v764, %v761
  %v803 = vpack.c.bf16 %v772, %v769
  %v804 = vpack.c.bf16 %v780, %v777
  %v805 = vpack.c.bf16 %v788, %v785
  %v806 = vpack.c.bf16 %v796, %v793
  %v807 = vld [vmem:[%s5] sm:$0xf]
  %v808 = vld [vmem:[%s5 + $0x4] sm:$0xf]
  %v809 = vld [vmem:[%s5 + $0x8] sm:$0xf]
  %v810 = vld [vmem:[%s5 + $0xc] sm:$0xf]
  %v811 = vld [vmem:[%s6] sm:$0xf]
  %v812 = vld [vmem:[%s6 + $0x4] sm:$0xf]
  %v813 = vld [vmem:[%s6 + $0x8] sm:$0xf]
  %v814 = vld [vmem:[%s6 + $0xc] sm:$0xf]
  %v819 = vunpack.c.l.b16 %v811
  %v820 = vunpack.c.l.b16 %v812
  %v821 = vunpack.c.l.b16 %v813
  %v822 = vunpack.c.l.b16 %v814
  %v823 = vpack.c.b16 %v820, %v819
  %v824 = vpack.c.b16 %v822, %v821
  %vm827 = vcmask 261120
  %v829 = vsel %vm827, %v550, 0
  %v832 = vsel %vm827, %v551, 0
  %v835 = vsel %vm827, %v552, 0
  %v838 = vsel %vm827, %v553, 0
  %v841 = vsel %vm827, %v554, 0
  %v844 = vsel %vm827, %v555, 0
  %v847 = vsel %vm827, %v556, 0
  %v850 = vsel %vm827, %v557, 0
  %852 = vmatprep.subr.bf16.mxu0 0
  %853 = vmatpush1.bf16.msra.mxu0 %v823
  %854 = vmatprep.subr.bf16.mxu0 0
  %855 = vmatpush1.bf16.msra.mxu0 %v824
  %856 = vmatprep.subr.bf16.mxu0 0
  %857 = vmatpush1.bf16.msra.mxu0 0
  %858 = vmatprep.subr.bf16.mxu0 0
  %859 = vmatpush1.bf16.msra.mxu0 0
  %860 = vmatprep.subr.bf16.mxu0 0
  %861 = vmatpush1.bf16.msra.mxu0 0
  %862 = vmatprep.subr.bf16.mxu0 0
  %863 = vmatpush1.bf16.msra.mxu0 0
  %864 = vmatprep.subr.bf16.mxu0 0
  %865 = vmatpush1.bf16.msra.mxu0 0
  %866 = vmatprep.subr.bf16.mxu0 0
  %867 = vmatpush1.bf16.msra.mxu0 0
  %868 = vmatprep.subr.bf16.mxu0 0
  %869 = vmatpush1.bf16.msra.mxu0 0
  %870 = vmatprep.subr.bf16.mxu0 0
  %871 = vmatpush1.bf16.msra.mxu0 0
  %872 = vmatprep.subr.bf16.mxu0 0
  %873 = vmatpush1.bf16.msra.mxu0 0
  %874 = vmatprep.subr.bf16.mxu0 0
  %875 = vmatpush1.bf16.msra.mxu0 0
  %876 = vmatprep.subr.bf16.mxu0 0
  %877 = vmatpush1.bf16.msra.mxu0 0
  %878 = vmatprep.subr.bf16.mxu0 0
  %879 = vmatpush1.bf16.msra.mxu0 0
  %880 = vmatprep.subr.bf16.mxu0 0
  %881 = vmatpush1.bf16.msra.mxu0 0
  %882 = vmatprep.subr.bf16.mxu0 0
  %883 = vmatpush1.bf16.msra.mxu0 0
  %884 = vmatprep.mubr.bf16.mxu0 0
  %885 = vmatmul.mubr.bf16.gmra.mrb[0].mxu0 %v829
  %v886 = vpop.f32.mrb[0].mxu0
  %v887 = vadd.f32 0.0, %v886
  %v888 = vpop.f32.mrb[0].mxu0
  %v889 = vpop.f32.mrb[0].mxu0
  %v890 = vadd.f32 0.0, %v889
  %v891 = vpop.f32.mrb[0].mxu0
  %892 = vmatprep.mubr.bf16.mxu0 0
  %893 = vmatmul.mubr.bf16.gmra.mrb[0].mxu0 %v832
  %v894 = vpop.f32.mrb[0].mxu0
  %v895 = vadd.f32 0.0, %v894
  %v896 = vpop.f32.mrb[0].mxu0
  %v897 = vpop.f32.mrb[0].mxu0
  %v898 = vadd.f32 0.0, %v897
  %v899 = vpop.f32.mrb[0].mxu0
  %900 = vmatprep.mubr.bf16.mxu0 0
  %901 = vmatmul.mubr.bf16.gmra.mrb[0].mxu0 %v835
  %v902 = vpop.f32.mrb[0].mxu0
  %v903 = vadd.f32 0.0, %v902
  %v904 = vpop.f32.mrb[0].mxu0
  %v905 = vpop.f32.mrb[0].mxu0
  %v906 = vadd.f32 0.0, %v905
  %v907 = vpop.f32.mrb[0].mxu0
  %908 = vmatprep.mubr.bf16.mxu0 0
  %909 = vmatmul.mubr.bf16.gmra.mrb[0].mxu0 %v838
  %v910 = vpop.f32.mrb[0].mxu0
  %v911 = vadd.f32 0.0, %v910
  %v912 = vpop.f32.mrb[0].mxu0
  %v913 = vpop.f32.mrb[0].mxu0
  %v914 = vadd.f32 0.0, %v913
  %v915 = vpop.f32.mrb[0].mxu0
  %916 = vmatprep.mubr.bf16.mxu0 0
  %917 = vmatmul.mubr.bf16.gmra.mrb[0].mxu0 %v841
  %v918 = vpop.f32.mrb[0].mxu0
  %v919 = vadd.f32 0.0, %v918
  %v920 = vpop.f32.mrb[0].mxu0
  %v921 = vpop.f32.mrb[0].mxu0
  %v922 = vadd.f32 0.0, %v921
  %v923 = vpop.f32.mrb[0].mxu0
  %924 = vmatprep.mubr.bf16.mxu0 0
  %925 = vmatmul.mubr.bf16.gmra.mrb[0].mxu0 %v844
  %v926 = vpop.f32.mrb[0].mxu0
  %v927 = vadd.f32 0.0, %v926
  %v928 = vpop.f32.mrb[0].mxu0
  %v929 = vpop.f32.mrb[0].mxu0
  %v930 = vadd.f32 0.0, %v929
  %v931 = vpop.f32.mrb[0].mxu0
  %932 = vmatprep.mubr.bf16.mxu0 0
  %933 = vmatmul.mubr.bf16.gmra.mrb[0].mxu0 %v847
  %v934 = vpop.f32.mrb[0].mxu0
  %v935 = vadd.f32 0.0, %v934
  %v936 = vpop.f32.mrb[0].mxu0
  %v937 = vpop.f32.mrb[0].mxu0
  %v938 = vadd.f32 0.0, %v937
  %v939 = vpop.f32.mrb[0].mxu0
  %940 = vmatprep.mubr.bf16.mxu0 0
  %941 = vmatmul.mubr.bf16.gmra.mrb[0].mxu0 %v850
  %v942 = vpop.f32.mrb[0].mxu0
  %v943 = vadd.f32 0.0, %v942
  %v944 = vpop.f32.mrb[0].mxu0
  %v945 = vpop.f32.mrb[0].mxu0
  %v946 = vadd.f32 0.0, %v945
  %v947 = vpop.f32.mrb[0].mxu0
  %948 = vdwg.mxu0
  %v953 = vunpack.c.l.b16 %v807
  %v954 = vunpack.c.l.b16 %v808
  %v955 = vunpack.c.l.b16 %v809
  %v956 = vunpack.c.l.b16 %v810
  %v957 = vpack.c.b16 %v954, %v953
  %v958 = vpack.c.b16 %v956, %v955
  %v962 = vsel %vm827, %v295, 0
  %v965 = vsel %vm827, %v296, 0
  %v968 = vsel %vm827, %v297, 0
  %v971 = vsel %vm827, %v298, 0
  %v974 = vsel %vm827, %v299, 0
  %v977 = vsel %vm827, %v300, 0
  %v980 = vsel %vm827, %v301, 0
  %v983 = vsel %vm827, %v302, 0
  %985 = vmatprep.subr.bf16.mxu0 0
  %986 = vmatpush1.bf16.msra.mxu0 %v957
  %987 = vmatprep.subr.bf16.mxu0 0
  %988 = vmatpush1.bf16.msra.mxu0 %v958
  %989 = vmatprep.subr.bf16.mxu0 0
  %990 = vmatpush1.bf16.msra.mxu0 0
  %991 = vmatprep.subr.bf16.mxu0 0
  %992 = vmatpush1.bf16.msra.mxu0 0
  %993 = vmatprep.subr.bf16.mxu0 0
  %994 = vmatpush1.bf16.msra.mxu0 0
  %995 = vmatprep.subr.bf16.mxu0 0
  %996 = vmatpush1.bf16.msra.mxu0 0
  %997 = vmatprep.subr.bf16.mxu0 0
  %998 = vmatpush1.bf16.msra.mxu0 0
  %999 = vmatprep.subr.bf16.mxu0 0
  %1000 = vmatpush1.bf16.msra.mxu0 0
  %1001 = vmatprep.subr.bf16.mxu0 0
  %1002 = vmatpush1.bf16.msra.mxu0 0
  %1003 = vmatprep.subr.bf16.mxu0 0
  %1004 = vmatpush1.bf16.msra.mxu0 0
  %1005 = vmatprep.subr.bf16.mxu0 0
  %1006 = vmatpush1.bf16.msra.mxu0 0
  %1007 = vmatprep.subr.bf16.mxu0 0
  %1008 = vmatpush1.bf16.msra.mxu0 0
  %1009 = vmatprep.subr.bf16.mxu0 0
  %1010 = vmatpush1.bf16.msra.mxu0 0
  %1011 = vmatprep.subr.bf16.mxu0 0
  %1012 = vmatpush1.bf16.msra.mxu0 0
  %1013 = vmatprep.subr.bf16.mxu0 0
  %1014 = vmatpush1.bf16.msra.mxu0 0
  %1015 = vmatprep.subr.bf16.mxu0 0
  %1016 = vmatpush1.bf16.msra.mxu0 0
  %1017 = vmatprep.mubr.bf16.mxu0 0
  %1018 = vmatmul.mubr.bf16.gmra.mrb[0].mxu0 %v962
  %v1019 = vpop.f32.mrb[0].mxu0
  %v1020 = vadd.f32 %v887, %v1019
  %v1021 = vpop.f32.mrb[0].mxu0
  %v1022 = vpop.f32.mrb[0].mxu0
  %v1023 = vadd.f32 %v890, %v1022
  %v1024 = vpop.f32.mrb[0].mxu0
  %1025 = vmatprep.mubr.bf16.mxu0 0
  %1026 = vmatmul.mubr.bf16.gmra.mrb[0].mxu0 %v965
  %v1027 = vpop.f32.mrb[0].mxu0
  %v1028 = vadd.f32 %v895, %v1027
  %v1029 = vpop.f32.mrb[0].mxu0
  %v1030 = vpop.f32.mrb[0].mxu0
  %v1031 = vadd.f32 %v898, %v1030
  %v1032 = vpop.f32.mrb[0].mxu0
  %1033 = vmatprep.mubr.bf16.mxu0 0
  %1034 = vmatmul.mubr.bf16.gmra.mrb[0].mxu0 %v968
  %v1035 = vpop.f32.mrb[0].mxu0
  %v1036 = vadd.f32 %v903, %v1035
  %v1037 = vpop.f32.mrb[0].mxu0
  %v1038 = vpop.f32.mrb[0].mxu0
  %v1039 = vadd.f32 %v906, %v1038
  %v1040 = vpop.f32.mrb[0].mxu0
  %1041 = vmatprep.mubr.bf16.mxu0 0
  %1042 = vmatmul.mubr.bf16.gmra.mrb[0].mxu0 %v971
  %v1043 = vpop.f32.mrb[0].mxu0
  %v1044 = vadd.f32 %v911, %v1043
  %v1045 = vpop.f32.mrb[0].mxu0
  %v1046 = vpop.f32.mrb[0].mxu0
  %v1047 = vadd.f32 %v914, %v1046
  %v1048 = vpop.f32.mrb[0].mxu0
  %1049 = vmatprep.mubr.bf16.mxu0 0
  %1050 = vmatmul.mubr.bf16.gmra.mrb[0].mxu0 %v974
  %v1051 = vpop.f32.mrb[0].mxu0
  %v1052 = vadd.f32 %v919, %v1051
  %v1053 = vpop.f32.mrb[0].mxu0
  %v1054 = vpop.f32.mrb[0].mxu0
  %v1055 = vadd.f32 %v922, %v1054
  %v1056 = vpop.f32.mrb[0].mxu0
  %1057 = vmatprep.mubr.bf16.mxu0 0
  %1058 = vmatmul.mubr.bf16.gmra.mrb[0].mxu0 %v977
  %v1059 = vpop.f32.mrb[0].mxu0
  %v1060 = vadd.f32 %v927, %v1059
  %v1061 = vpop.f32.mrb[0].mxu0
  %v1062 = vpop.f32.mrb[0].mxu0
  %v1063 = vadd.f32 %v930, %v1062
  %v1064 = vpop.f32.mrb[0].mxu0
  %1065 = vmatprep.mubr.bf16.mxu0 0
  %1066 = vmatmul.mubr.bf16.gmra.mrb[0].mxu0 %v980
  %v1067 = vpop.f32.mrb[0].mxu0
  %v1068 = vadd.f32 %v935, %v1067
  %v1069 = vpop.f32.mrb[0].mxu0
  %v1070 = vpop.f32.mrb[0].mxu0
  %v1071 = vadd.f32 %v938, %v1070
  %v1072 = vpop.f32.mrb[0].mxu0
  %1073 = vmatprep.mubr.bf16.mxu0 0
  %1074 = vmatmul.mubr.bf16.gmra.mrb[0].mxu0 %v983
  %v1075 = vpop.f32.mrb[0].mxu0
  %v1076 = vadd.f32 %v943, %v1075
  %v1077 = vpop.f32.mrb[0].mxu0
  %v1078 = vpop.f32.mrb[0].mxu0
  %v1079 = vadd.f32 %v946, %v1078
  %v1080 = vpop.f32.mrb[0].mxu0
  %1081 = vdwg.mxu0
  %v1082 = vld [vmem:[%s7] sm:$0xf]
  %v1083 = vld [vmem:[%s7 + $0x4] sm:$0xf]
  %v1084 = vld [vmem:[%s7 + $0x8] sm:$0xf]
  %v1085 = vld [vmem:[%s7 + $0xc] sm:$0xf]
  %v1090 = vunpack.c.l.b16 %v1082
  %v1091 = vunpack.c.l.b16 %v1083
  %v1092 = vunpack.c.l.b16 %v1084
  %v1093 = vunpack.c.l.b16 %v1085
  %v1094 = vpack.c.b16 %v1091, %v1090
  %v1095 = vpack.c.b16 %v1093, %v1092
  %v1099 = vsel %vm827, %v799, 0
  %v1102 = vsel %vm827, %v800, 0
  %v1105 = vsel %vm827, %v801, 0
  %v1108 = vsel %vm827, %v802, 0
  %v1111 = vsel %vm827, %v803, 0
  %v1114 = vsel %vm827, %v804, 0
  %v1117 = vsel %vm827, %v805, 0
  %v1120 = vsel %vm827, %v806, 0
  %1122 = vmatprep.subr.bf16.mxu0 0
  %1123 = vmatpush1.bf16.msra.mxu0 %v1094
  %1124 = vmatprep.subr.bf16.mxu0 0
  %1125 = vmatpush1.bf16.msra.mxu0 %v1095
  %1126 = vmatprep.subr.bf16.mxu0 0
  %1127 = vmatpush1.bf16.msra.mxu0 0
  %1128 = vmatprep.subr.bf16.mxu0 0
  %1129 = vmatpush1.bf16.msra.mxu0 0
  %1130 = vmatprep.subr.bf16.mxu0 0
  %1131 = vmatpush1.bf16.msra.mxu0 0
  %1132 = vmatprep.subr.bf16.mxu0 0
  %1133 = vmatpush1.bf16.msra.mxu0 0
  %1134 = vmatprep.subr.bf16.mxu0 0
  %1135 = vmatpush1.bf16.msra.mxu0 0
  %1136 = vmatprep.subr.bf16.mxu0 0
  %1137 = vmatpush1.bf16.msra.mxu0 0
  %1138 = vmatprep.subr.bf16.mxu0 0
  %1139 = vmatpush1.bf16.msra.mxu0 0
  %1140 = vmatprep.subr.bf16.mxu0 0
  %1141 = vmatpush1.bf16.msra.mxu0 0
  %1142 = vmatprep.subr.bf16.mxu0 0
  %1143 = vmatpush1.bf16.msra.mxu0 0
  %1144 = vmatprep.subr.bf16.mxu0 0
  %1145 = vmatpush1.bf16.msra.mxu0 0
  %1146 = vmatprep.subr.bf16.mxu0 0
  %1147 = vmatpush1.bf16.msra.mxu0 0
  %1148 = vmatprep.subr.bf16.mxu0 0
  %1149 = vmatpush1.bf16.msra.mxu0 0
  %1150 = vmatprep.subr.bf16.mxu0 0
  %1151 = vmatpush1.bf16.msra.mxu0 0
  %1152 = vmatprep.subr.bf16.mxu0 0
  %1153 = vmatpush1.bf16.msra.mxu0 0
  %1154 = vmatprep.mubr.bf16.mxu0 0
  %1155 = vmatmul.mubr.bf16.gmra.mrb[0].mxu0 %v1099
  %v1156 = vpop.f32.mrb[0].mxu0
  %v1157 = vadd.f32 0.0, %v1156
  %v1158 = vpop.f32.mrb[0].mxu0
  %v1159 = vpop.f32.mrb[0].mxu0
  %v1160 = vadd.f32 0.0, %v1159
  %v1161 = vpop.f32.mrb[0].mxu0
  %1162 = vmatprep.mubr.bf16.mxu0 0
  %1163 = vmatmul.mubr.bf16.gmra.mrb[0].mxu0 %v1102
  %v1164 = vpop.f32.mrb[0].mxu0
  %v1165 = vadd.f32 0.0, %v1164
  %v1166 = vpop.f32.mrb[0].mxu0
  %v1167 = vpop.f32.mrb[0].mxu0
  %v1168 = vadd.f32 0.0, %v1167
  %v1169 = vpop.f32.mrb[0].mxu0
  %1170 = vmatprep.mubr.bf16.mxu0 0
  %1171 = vmatmul.mubr.bf16.gmra.mrb[0].mxu0 %v1105
  %v1172 = vpop.f32.mrb[0].mxu0
  %v1173 = vadd.f32 0.0, %v1172
  %v1174 = vpop.f32.mrb[0].mxu0
  %v1175 = vpop.f32.mrb[0].mxu0
  %v1176 = vadd.f32 0.0, %v1175
  %v1177 = vpop.f32.mrb[0].mxu0
  %1178 = vmatprep.mubr.bf16.mxu0 0
  %1179 = vmatmul.mubr.bf16.gmra.mrb[0].mxu0 %v1108
  %v1180 = vpop.f32.mrb[0].mxu0
  %v1181 = vadd.f32 0.0, %v1180
  %v1182 = vpop.f32.mrb[0].mxu0
  %v1183 = vpop.f32.mrb[0].mxu0
  %v1184 = vadd.f32 0.0, %v1183
  %v1185 = vpop.f32.mrb[0].mxu0
  %1186 = vmatprep.mubr.bf16.mxu0 0
  %1187 = vmatmul.mubr.bf16.gmra.mrb[0].mxu0 %v1111
  %v1188 = vpop.f32.mrb[0].mxu0
  %v1189 = vadd.f32 0.0, %v1188
  %v1190 = vpop.f32.mrb[0].mxu0
  %v1191 = vpop.f32.mrb[0].mxu0
  %v1192 = vadd.f32 0.0, %v1191
  %v1193 = vpop.f32.mrb[0].mxu0
  %1194 = vmatprep.mubr.bf16.mxu0 0
  %1195 = vmatmul.mubr.bf16.gmra.mrb[0].mxu0 %v1114
  %v1196 = vpop.f32.mrb[0].mxu0
  %v1197 = vadd.f32 0.0, %v1196
  %v1198 = vpop.f32.mrb[0].mxu0
  %v1199 = vpop.f32.mrb[0].mxu0
  %v1200 = vadd.f32 0.0, %v1199
  %v1201 = vpop.f32.mrb[0].mxu0
  %1202 = vmatprep.mubr.bf16.mxu0 0
  %1203 = vmatmul.mubr.bf16.gmra.mrb[0].mxu0 %v1117
  %v1204 = vpop.f32.mrb[0].mxu0
  %v1205 = vadd.f32 0.0, %v1204
  %v1206 = vpop.f32.mrb[0].mxu0
  %v1207 = vpop.f32.mrb[0].mxu0
  %v1208 = vadd.f32 0.0, %v1207
  %v1209 = vpop.f32.mrb[0].mxu0
  %1210 = vmatprep.mubr.bf16.mxu0 0
  %1211 = vmatmul.mubr.bf16.gmra.mrb[0].mxu0 %v1120
  %v1212 = vpop.f32.mrb[0].mxu0
  %v1213 = vadd.f32 0.0, %v1212
  %v1214 = vpop.f32.mrb[0].mxu0
  %v1215 = vpop.f32.mrb[0].mxu0
  %v1216 = vadd.f32 0.0, %v1215
  %v1217 = vpop.f32.mrb[0].mxu0
  %1218 = vdwg.mxu0
  %v1219 = vadd.f32 %v1020, %v1157
  %v1220 = vadd.f32 %v1023, %v1160
  %v1221 = vadd.f32 %v1028, %v1165
  %v1222 = vadd.f32 %v1031, %v1168
  %v1223 = vadd.f32 %v1036, %v1173
  %v1224 = vadd.f32 %v1039, %v1176
  %v1225 = vadd.f32 %v1044, %v1181
  %v1226 = vadd.f32 %v1047, %v1184
  %v1227 = vadd.f32 %v1052, %v1189
  %v1228 = vadd.f32 %v1055, %v1192
  %v1229 = vadd.f32 %v1060, %v1197
  %v1230 = vadd.f32 %v1063, %v1200
  %v1231 = vadd.f32 %v1068, %v1205
  %v1232 = vadd.f32 %v1071, %v1208
  %v1233 = vadd.f32 %v1076, %v1213
  %v1234 = vadd.f32 %v1079, %v1216
  %v1235 = vtanh.pop %v1219
  %v1236 = vtanh.pop %v1220
  %v1237 = vtanh.pop %v1221
  %v1238 = vtanh.pop %v1222
  %v1239 = vtanh.pop %v1223
  %v1240 = vtanh.pop %v1224
  %v1241 = vtanh.pop %v1225
  %v1242 = vtanh.pop %v1226
  %v1243 = vtanh.pop %v1227
  %v1244 = vtanh.pop %v1228
  %v1245 = vtanh.pop %v1229
  %v1246 = vtanh.pop %v1230
  %v1247 = vtanh.pop %v1231
  %v1248 = vtanh.pop %v1232
  %v1249 = vtanh.pop %v1233
  %v1250 = vtanh.pop %v1234
  %v1251 = vpack.c.bf16 %v1236, %v1235
  %v1252 = vpack.c.bf16 %v1238, %v1237
  %v1253 = vpack.c.bf16 %v1240, %v1239
  %v1254 = vpack.c.bf16 %v1242, %v1241
  %v1255 = vpack.c.bf16 %v1244, %v1243
  %v1256 = vpack.c.bf16 %v1246, %v1245
  %v1257 = vpack.c.bf16 %v1248, %v1247
  %v1258 = vpack.c.bf16 %v1250, %v1249
  %v1259 = vld [vmem:[%s8] sm:$0xf]
  %v1260 = vld [vmem:[%s8 + $0x4] sm:$0xf]
  %v1261 = vld [vmem:[%s8 + $0x8] sm:$0xf]
  %v1262 = vld [vmem:[%s8 + $0xc] sm:$0xf]
  %v1263 = vld [vmem:[%s8 + $0x10] sm:$0xf]
  %v1264 = vld [vmem:[%s8 + $0x14] sm:$0xf]
  %v1265 = vld [vmem:[%s8 + $0x18] sm:$0xf]
  %v1266 = vld [vmem:[%s8 + $0x1c] sm:$0xf]
  %v1267 = vld [vmem:[%s8 + $0x20] sm:$0xf]
  %v1268 = vld [vmem:[%s8 + $0x24] sm:$0xf]
  %v1269 = vld [vmem:[%s8 + $0x28] sm:$0xf]
  %v1270 = vld [vmem:[%s8 + $0x2c] sm:$0xf]
  %v1271 = vld [vmem:[%s8 + $0x30] sm:$0xf]
  %v1272 = vld [vmem:[%s8 + $0x34] sm:$0xf]
  %v1273 = vld [vmem:[%s8 + $0x38] sm:$0xf]
  %v1274 = vld [vmem:[%s8 + $0x3c] sm:$0xf]
  %v1275 = vld [vmem:[%s9] sm:$0x1]
  %v1277 = vlaneseq
  %v1278 = vshrl.u32 %v1277, 7
  %v1279 = vsub.s32 0, %v1278
  %v1280 = vrot.slane %v1275, %v1279
  %v1298 = vunpack.c.l.b16 %v1259
  %v1299 = vunpack.c.l.b16 %v1260
  %v1300 = vunpack.c.l.b16 %v1261
  %v1301 = vunpack.c.l.b16 %v1262
  %v1302 = vunpack.c.l.b16 %v1263
  %v1303 = vunpack.c.l.b16 %v1264
  %v1304 = vunpack.c.l.b16 %v1265
  %v1305 = vunpack.c.l.b16 %v1266
  %v1306 = vunpack.c.l.b16 %v1267
  %v1307 = vunpack.c.l.b16 %v1268
  %v1308 = vunpack.c.l.b16 %v1269
  %v1309 = vunpack.c.l.b16 %v1270
  %v1310 = vunpack.c.l.b16 %v1271
  %v1311 = vunpack.c.l.b16 %v1272
  %v1312 = vunpack.c.l.b16 %v1273
  %v1313 = vunpack.c.l.b16 %v1274
  %v1314 = vpack.c.b16 %v1299, %v1298
  %v1315 = vpack.c.b16 %v1301, %v1300
  %v1316 = vpack.c.b16 %v1303, %v1302
  %v1317 = vpack.c.b16 %v1305, %v1304
  %v1318 = vpack.c.b16 %v1307, %v1306
  %v1319 = vpack.c.b16 %v1309, %v1308
  %v1320 = vpack.c.b16 %v1311, %v1310
  %v1321 = vpack.c.b16 %v1313, %v1312
  %1330 = vmatprep.subr.bf16.mxu0 0
  %1331 = vmatpush1.bf16.msra.mxu0 %v1314
  %1332 = vmatprep.subr.bf16.mxu0 0
  %1333 = vmatpush1.bf16.msra.mxu0 %v1315
  %1334 = vmatprep.subr.bf16.mxu0 0
  %1335 = vmatpush1.bf16.msra.mxu0 %v1316
  %1336 = vmatprep.subr.bf16.mxu0 0
  %1337 = vmatpush1.bf16.msra.mxu0 %v1317
  %1338 = vmatprep.subr.bf16.mxu0 0
  %1339 = vmatpush1.bf16.msra.mxu0 %v1318
  %1340 = vmatprep.subr.bf16.mxu0 0
  %1341 = vmatpush1.bf16.msra.mxu0 %v1319
  %1342 = vmatprep.subr.bf16.mxu0 0
  %1343 = vmatpush1.bf16.msra.mxu0 %v1320
  %1344 = vmatprep.subr.bf16.mxu0 0
  %1345 = vmatpush1.bf16.msra.mxu0 %v1321
  %1346 = vmatprep.subr.bf16.mxu0 0
  %1347 = vmatpush1.bf16.msra.mxu0 0
  %1348 = vmatprep.subr.bf16.mxu0 0
  %1349 = vmatpush1.bf16.msra.mxu0 0
  %1350 = vmatprep.subr.bf16.mxu0 0
  %1351 = vmatpush1.bf16.msra.mxu0 0
  %1352 = vmatprep.subr.bf16.mxu0 0
  %1353 = vmatpush1.bf16.msra.mxu0 0
  %1354 = vmatprep.subr.bf16.mxu0 0
  %1355 = vmatpush1.bf16.msra.mxu0 0
  %1356 = vmatprep.subr.bf16.mxu0 0
  %1357 = vmatpush1.bf16.msra.mxu0 0
  %1358 = vmatprep.subr.bf16.mxu0 0
  %1359 = vmatpush1.bf16.msra.mxu0 0
  %1360 = vmatprep.subr.bf16.mxu0 0
  %1361 = vmatpush1.bf16.msra.mxu0 0
  %1362 = vmatprep.mubr.bf16.mxu0 0
  %1363 = vmatmul.mubr.bf16.gmra.mrb[0].mxu0 %v1251
  %v1364 = vpop.f32.mrb[0].mxu0
  %v1365 = vadd.f32 %v1280, %v1364
  %v1366 = vpop.f32.mrb[0].mxu0
  %v1367 = vpop.f32.mrb[0].mxu0
  %v1368 = vadd.f32 %v1280, %v1367
  %v1369 = vpop.f32.mrb[0].mxu0
  %1370 = vmatprep.mubr.bf16.mxu0 0
  %1371 = vmatmul.mubr.bf16.gmra.mrb[0].mxu0 %v1252
  %v1372 = vpop.f32.mrb[0].mxu0
  %v1373 = vadd.f32 %v1280, %v1372
  %v1374 = vpop.f32.mrb[0].mxu0
  %v1375 = vpop.f32.mrb[0].mxu0
  %v1376 = vadd.f32 %v1280, %v1375
  %v1377 = vpop.f32.mrb[0].mxu0
  %1378 = vmatprep.mubr.bf16.mxu0 0
  %1379 = vmatmul.mubr.bf16.gmra.mrb[0].mxu0 %v1253
  %v1380 = vpop.f32.mrb[0].mxu0
  %v1381 = vadd.f32 %v1280, %v1380
  %v1382 = vpop.f32.mrb[0].mxu0
  %v1383 = vpop.f32.mrb[0].mxu0
  %v1384 = vadd.f32 %v1280, %v1383
  %v1385 = vpop.f32.mrb[0].mxu0
  %1386 = vmatprep.mubr.bf16.mxu0 0
  %1387 = vmatmul.mubr.bf16.gmra.mrb[0].mxu0 %v1254
  %v1388 = vpop.f32.mrb[0].mxu0
  %v1389 = vadd.f32 %v1280, %v1388
  %v1390 = vpop.f32.mrb[0].mxu0
  %v1391 = vpop.f32.mrb[0].mxu0
  %v1392 = vadd.f32 %v1280, %v1391
  %v1393 = vpop.f32.mrb[0].mxu0
  %1394 = vmatprep.mubr.bf16.mxu0 0
  %1395 = vmatmul.mubr.bf16.gmra.mrb[0].mxu0 %v1255
  %v1396 = vpop.f32.mrb[0].mxu0
  %v1397 = vadd.f32 %v1280, %v1396
  %v1398 = vpop.f32.mrb[0].mxu0
  %v1399 = vpop.f32.mrb[0].mxu0
  %v1400 = vadd.f32 %v1280, %v1399
  %v1401 = vpop.f32.mrb[0].mxu0
  %1402 = vmatprep.mubr.bf16.mxu0 0
  %1403 = vmatmul.mubr.bf16.gmra.mrb[0].mxu0 %v1256
  %v1404 = vpop.f32.mrb[0].mxu0
  %v1405 = vadd.f32 %v1280, %v1404
  %v1406 = vpop.f32.mrb[0].mxu0
  %v1407 = vpop.f32.mrb[0].mxu0
  %v1408 = vadd.f32 %v1280, %v1407
  %v1409 = vpop.f32.mrb[0].mxu0
  %1410 = vmatprep.mubr.bf16.mxu0 0
  %1411 = vmatmul.mubr.bf16.gmra.mrb[0].mxu0 %v1257
  %v1412 = vpop.f32.mrb[0].mxu0
  %v1413 = vadd.f32 %v1280, %v1412
  %v1414 = vpop.f32.mrb[0].mxu0
  %v1415 = vpop.f32.mrb[0].mxu0
  %v1416 = vadd.f32 %v1280, %v1415
  %v1417 = vpop.f32.mrb[0].mxu0
  %1418 = vmatprep.mubr.bf16.mxu0 0
  %1419 = vmatmul.mubr.bf16.gmra.mrb[0].mxu0 %v1258
  %v1420 = vpop.f32.mrb[0].mxu0
  %v1421 = vadd.f32 %v1280, %v1420
  %v1422 = vpop.f32.mrb[0].mxu0
  %v1423 = vpop.f32.mrb[0].mxu0
  %v1424 = vadd.f32 %v1280, %v1423
  %v1425 = vpop.f32.mrb[0].mxu0
  %1426 = vdwg.mxu0
  %v1427 = vtanh.pop %v1365
  %v1428 = vtanh.pop %v1368
  %v1429 = vtanh.pop %v1373
  %v1430 = vtanh.pop %v1376
  %v1431 = vtanh.pop %v1381
  %v1432 = vtanh.pop %v1384
  %v1433 = vtanh.pop %v1389
  %v1434 = vtanh.pop %v1392
  %v1435 = vtanh.pop %v1397
  %v1436 = vtanh.pop %v1400
  %v1437 = vtanh.pop %v1405
  %v1438 = vtanh.pop %v1408
  %v1439 = vtanh.pop %v1413
  %v1440 = vtanh.pop %v1416
  %v1441 = vtanh.pop %v1421
  %v1442 = vtanh.pop %v1424
  %v1443 = vld [vmem:[%s10] sm:$0x1]
  %s1444 = sld [smem:[#allocation2]]
  %v1445 = vstv %s1444
  %1446 = vmatprep.subr.mxu0 0.0
  %1447 = vmatpush1.xpose.msra.mxu0 %v1427
  %1448 = vmatprep.subr.mxu0 0.0
  %1449 = vmatpush1.xpose.msra.mxu0 %v1428
  %1450 = vmatprep.subr.mxu0 0.0
  %1451 = vmatpush1.xpose.msra.mxu0 %v1429
  %1452 = vmatprep.subr.mxu0 0.0
  %1453 = vmatpush1.xpose.msra.mxu0 %v1430
  %1454 = vmatprep.subr.mxu0 0.0
  %1455 = vmatpush1.xpose.msra.mxu0 %v1431
  %1456 = vmatprep.subr.mxu0 0.0
  %1457 = vmatpush1.xpose.msra.mxu0 %v1432
  %1458 = vmatprep.subr.mxu0 0.0
  %1459 = vmatpush1.xpose.msra.mxu0 %v1433
  %1460 = vmatprep.subr.mxu0 0.0
  %1461 = vmatpush1.xpose.msra.mxu0 %v1434
  %1462 = vmatprep.subr.mxu0 0.0
  %1463 = vmatpush1.xpose.msra.mxu0 %v1435
  %1464 = vmatprep.subr.mxu0 0.0
  %1465 = vmatpush1.xpose.msra.mxu0 %v1436
  %1466 = vmatprep.subr.mxu0 0.0
  %1467 = vmatpush1.xpose.msra.mxu0 %v1437
  %1468 = vmatprep.subr.mxu0 0.0
  %1469 = vmatpush1.xpose.msra.mxu0 %v1438
  %1470 = vmatprep.subr.mxu0 0.0
  %1471 = vmatpush1.xpose.msra.mxu0 %v1439
  %1472 = vmatprep.subr.mxu0 0.0
  %1473 = vmatpush1.xpose.msra.mxu0 %v1440
  %1474 = vmatprep.subr.mxu0 0.0
  %1475 = vmatpush1.xpose.msra.mxu0 %v1441
  %1476 = vmatprep.subr.mxu0 0.0
  %1477 = vmatpush1.xpose.msra.mxu0 %v1442
  %1478 = vmatprep.subr.mxu0 0.0
  %1479 = vmatpush1.xpose.msra.mxu0 0.0
  %1480 = vmatprep.subr.mxu0 0.0
  %1481 = vmatpush1.xpose.msra.mxu0 0.0
  %1482 = vmatprep.subr.mxu0 0.0
  %1483 = vmatpush1.xpose.msra.mxu0 0.0
  %1484 = vmatprep.subr.mxu0 0.0
  %1485 = vmatpush1.xpose.msra.mxu0 0.0
  %1486 = vmatprep.subr.mxu0 0.0
  %1487 = vmatpush1.xpose.msra.mxu0 0.0
  %1488 = vmatprep.subr.mxu0 0.0
  %1489 = vmatpush1.xpose.msra.mxu0 0.0
  %1490 = vmatprep.subr.mxu0 0.0
  %1491 = vmatpush1.xpose.msra.mxu0 0.0
  %1492 = vmatprep.subr.mxu0 0.0
  %1493 = vmatpush1.xpose.msra.mxu0 0.0
  %1494 = vmatprep.subr.mxu0 0.0
  %1495 = vmatpush1.xpose.msra.mxu0 0.0
  %1496 = vmatprep.subr.mxu0 0.0
  %1497 = vmatpush1.xpose.msra.mxu0 0.0
  %1498 = vmatprep.subr.mxu0 0.0
  %1499 = vmatpush1.xpose.msra.mxu0 0.0
  %1500 = vmatprep.subr.mxu0 0.0
  %1501 = vmatpush1.xpose.msra.mxu0 0.0
  %1502 = vmatprep.subr.mxu0 0.0
  %1503 = vmatpush1.xpose.msra.mxu0 0.0
  %1504 = vmatprep.subr.mxu0 0.0
  %1505 = vmatpush1.xpose.msra.mxu0 0.0
  %1506 = vmatprep.subr.mxu0 0.0
  %1507 = vmatpush1.xpose.msra.mxu0 0.0
  %1508 = vmatprep.subr.mxu0 0.0
  %1509 = vmatpush1.xpose.msra.mxu0 0.0
  %1510 = vmatprep.mubr.f32.mxu0 0.0
  %1511 = vmatmul.mubr.f32.gmra.mrb[0].mxu0 %v1443
  %v1512 = vpop.f32.mrb[0].mxu0
  %v1513 = vadd.f32 %v1445, %v1512
  %v1514 = vpop.f32.mrb[0].mxu0
  %1515 = vdwg.mxu0
  %1516 = vst [vmem:[%s12] sm:$0x1] %v1513
  // Predicated region
  $region50: #{_er_mlp_forward_impl.1} parent=0 // pred_check
    _
  $region51: #{_er_mlp_forward_impl.1} parent=0 // pred_check_branch
    %1518 = sbr.rel (0) target = $region53
  $region52: #{_er_mlp_forward_impl.1} parent=0 // pred_region
    _
  $region53: #{_er_mlp_forward_impl.1} parent=0 // pred_fallthru
    _
  // Predicated region
  $region54: #{_er_mlp_forward_impl.1} parent=0 // pred_check
    _
  $region55: #{_er_mlp_forward_impl.1} parent=0 // pred_check_branch
    %1520 = sbr.rel (0) target = $region57
  $region56: #{_er_mlp_forward_impl.1} parent=0 // pred_region
    _
  $region57: #{_er_mlp_forward_impl.1} parent=0 // pred_fallthru
    _

</llo_original>
